<compile_context>
chip_gen: v7x
topology: tpu7x:2x2x1
jax: 0.10.0
libtpu: 0.0.40
codegen_flags: <defaults>
</compile_context>

<pallas_src>
import numpy as np

import jax
import jax.numpy as jnp
from jax.experimental import pallas as pl
from jax.experimental.pallas import tpu as pltpu

OUT = 10     # CIFAR10 classes
LANE = 128   # TPU lane width


# ---------------------------------------------------------------------------
# Fused whole-network kernel.  One grid step == one image.
# ---------------------------------------------------------------------------
def testfull_kernel(x_ref, w1m_ref, p1h_ref, p1v_ref, w2m_ref, p2h_ref, p2v_ref,
                    w3m_ref, wf_ref, out_ref, a1_ref, a2_ref, a3_ref):
    f32 = jnp.float32

    # ---- conv1 (5x5) + ReLU + 2x2 avg pool --------------------------------
    kh1 = w1m_ref.shape[0]
    oh1 = x_ref.shape[1] - kh1 + 1
    h1 = jnp.dot(x_ref[0, 0:oh1, :], w1m_ref[0], preferred_element_type=f32)
    for ki in range(1, kh1):
        h1 += jnp.dot(x_ref[0, ki:ki + oh1, :], w1m_ref[ki],
                      preferred_element_type=f32)
    h1 = jnp.maximum(h1, 0.0)
    a1_ref[...] = jnp.dot(p1v_ref[...],
                          jnp.dot(h1, p1h_ref[...], preferred_element_type=f32),
                          preferred_element_type=f32)

    # ---- conv2 (3x3) + ReLU + 2x2 avg pool --------------------------------
    kh2 = w2m_ref.shape[0]
    oh2 = a1_ref.shape[0] - kh2 + 1
    h2 = jnp.dot(a1_ref[0:oh2, :], w2m_ref[0], preferred_element_type=f32)
    for ki in range(1, kh2):
        h2 += jnp.dot(a1_ref[ki:ki + oh2, :], w2m_ref[ki],
                      preferred_element_type=f32)
    h2 = jnp.maximum(h2, 0.0)
    a2_ref[...] = jnp.dot(p2v_ref[...],
                          jnp.dot(h2, p2h_ref[...], preferred_element_type=f32),
                          preferred_element_type=f32)

    # ---- conv3 (3x3) + ReLU ------------------------------------------------
    kh3 = w3m_ref.shape[0]
    oh3 = a2_ref.shape[0] - kh3 + 1
    h3 = jnp.dot(a2_ref[0:oh3, :], w3m_ref[0], preferred_element_type=f32)
    for ki in range(1, kh3):
        h3 += jnp.dot(a2_ref[ki:ki + oh3, :], w3m_ref[ki],
                      preferred_element_type=f32)
    a3_ref[...] = jnp.maximum(h3, 0.0)

    # ---- fc1: row-wise accumulation over the (OH3, OW3*C) activation ------
    logits = jnp.dot(a3_ref[0:1, :], wf_ref[0], preferred_element_type=f32)
    for h in range(1, a3_ref.shape[0]):
        logits += jnp.dot(a3_ref[h:h + 1, :], wf_ref[h],
                          preferred_element_type=f32)
    out_ref[0] = logits.astype(out_ref.dtype)


# ---------------------------------------------------------------------------
# Forward wrapper: one pallas_call for the whole network.
# ---------------------------------------------------------------------------
def testfull_forward(x_nchw, lowered):
    """x: (B, 3, 32, 32) f32 -> logits (B, 10) f32."""
    w1m, p1h, p1v, w2m, p2h, p2v, w3m, wf3 = lowered
    B, Cin, H, W = x_nchw.shape
    # NCHW -> "image rows" layout (B, H, W*Cin)
    x_rows = jnp.transpose(x_nchw, (0, 2, 3, 1)).reshape(B, H, W * Cin)
    nlane = wf3.shape[2]

    # advisory cost estimate (helps XLA schedule around the custom call)
    kh1, k1, n1 = w1m.shape
    kh2, k2, n2 = w2m.shape
    kh3, k3, n3 = w3m.shape
    oh1, h1p = H - kh1 + 1, p1v.shape[0]
    oh2, h2p = h1p - kh2 + 1, p2v.shape[0]
    oh3 = h2p - kh3 + 1
    flops = int(B) * 2 * (
        kh1 * oh1 * k1 * n1 + oh1 * p1h.shape[0] * p1h.shape[1]
        + h1p * p1v.shape[1] * p1h.shape[1]
        + kh2 * oh2 * k2 * n2 + oh2 * p2h.shape[0] * p2h.shape[1]
        + h2p * p2v.shape[1] * p2h.shape[1]
        + kh3 * oh3 * k3 * n3 + oh3 * wf3.shape[1] * wf3.shape[2])
    bytes_accessed = 4 * (x_rows.size + sum(a.size for a in lowered) + B * nlane)

    out = pl.pallas_call(
        testfull_kernel,
        out_shape=jax.ShapeDtypeStruct((B, 1, nlane), jnp.float32),
        grid_spec=pltpu.PrefetchScalarGridSpec(
            num_scalar_prefetch=0,
            grid=(B,),
            in_specs=[
                # per-image activation block (streamed, double-buffered)
                pl.BlockSpec((1, H, W * Cin), lambda b: (b, 0, 0)),
                # weights / pool matrices: constant index_map -> VMEM-resident
                pl.BlockSpec(w1m.shape, lambda b: (0, 0, 0)),
                pl.BlockSpec(p1h.shape, lambda b: (0, 0)),
                pl.BlockSpec(p1v.shape, lambda b: (0, 0)),
                pl.BlockSpec(w2m.shape, lambda b: (0, 0, 0)),
                pl.BlockSpec(p2h.shape, lambda b: (0, 0)),
                pl.BlockSpec(p2v.shape, lambda b: (0, 0)),
                pl.BlockSpec(w3m.shape, lambda b: (0, 0, 0)),
                pl.BlockSpec(wf3.shape, lambda b: (0, 0, 0)),
            ],
            out_specs=pl.BlockSpec((1, 1, nlane), lambda b: (b, 0, 0)),
            scratch_shapes=[
                pltpu.VMEM((p1v.shape[0], p1h.shape[1]), jnp.float32),  # pooled conv1
                pltpu.VMEM((p2v.shape[0], p2h.shape[1]), jnp.float32),  # pooled conv2
                pltpu.VMEM((wf3.shape[0], wf3.shape[1]), jnp.float32),  # conv3 act
            ],
        ),
        compiler_params=pltpu.CompilerParams(
            dimension_semantics=("parallel",)),
        cost_estimate=pl.CostEstimate(
            flops=flops, transcendentals=0, bytes_accessed=int(bytes_accessed)),
    )(x_rows, w1m, p1h, p1v, w2m, p2h, p2v, w3m, wf3)
    return out[:, 0, :OUT]


# ---------------------------------------------------------------------------
# Parameter init + host-side (one-time) lowering into kernel layouts.
# ---------------------------------------------------------------------------
def init_params(key, channel=8, scale=1):
    c = int(channel * scale)
    k1, k2, k3, k4 = jax.random.split(key, 4)

    def u(k, shape, fan_in):
        b = 1.0 / jnp.sqrt(fan_in)
        return jax.random.uniform(k, shape, jnp.float32, -b, b)

    # conv weights stored patch-flattened as (KH*KW*Cin, Cout), feature order (kh, kw, cin)
    w1 = u(k1, (5 * 5 * 3, c), 5 * 5 * 3)
    w2 = u(k2, (3 * 3 * c, c), 3 * 3 * c)
    w3 = u(k3, (3 * 3 * c, c), 3 * 3 * c)
    # fc weight rows in NHWC flatten order (h, w, c)
    wf = u(k4, (c * 4 * 4, OUT), c * 4 * 4)
    return w1, w2, w3, wf


def prepare_params(params, channel=8, scale=1):
    """Host-side lowering of the raw weights into the fused kernel's layouts."""
    w1, w2, w3, wf = (np.asarray(p, np.float32) for p in params)
    c = int(channel * scale)

    def lower_conv_rows(w_flat, k, cin, cout, w_in):
        # (k*k*cin, cout) -> (k, w_in*cin, ow*cout) banded "row conv" matrices
        ow = w_in - k + 1
        w4 = w_flat.reshape(k, k, cin, cout)
        m = np.zeros((k, w_in * cin, ow * cout), np.float32)
        for ki in range(k):
            for o in range(ow):
                for kj in range(k):
                    w = o + kj
                    m[ki, w * cin:(w + 1) * cin, o * cout:(o + 1) * cout] = w4[ki, kj]
        return jnp.asarray(m)

    def pool_mats(h_in, w_in, cc):
        ph = np.zeros((w_in * cc, (w_in // 2) * cc), np.float32)
        for o in range(w_in // 2):
            for dc in range(cc):
                ph[(2 * o) * cc + dc, o * cc + dc] = 0.5
                ph[(2 * o + 1) * cc + dc, o * cc + dc] = 0.5
        pv = np.zeros((h_in // 2, h_in), np.float32)
        for o in range(h_in // 2):
            pv[o, 2 * o] = 0.5
            pv[o, 2 * o + 1] = 0.5
        return jnp.asarray(ph), jnp.asarray(pv)

    w1m = lower_conv_rows(w1, 5, 3, c, 32)      # (5, 96, 28c)
    p1h, p1v = pool_mats(28, 28, c)             # (28c, 14c), (14, 28)
    w2m = lower_conv_rows(w2, 3, c, c, 14)      # (3, 14c, 12c)
    p2h, p2v = pool_mats(12, 12, c)             # (12c, 6c), (6, 12)
    w3m = lower_conv_rows(w3, 3, c, c, 6)       # (3, 6c, 4c)
    # fc: (4*4*c, 10) NHWC-flatten-ordered rows -> (4, 4c, 128) lane-padded
    wf3 = np.zeros((4, 4 * c, LANE), np.float32)
    wf3[:, :, :OUT] = wf.reshape(4, 4 * c, OUT)
    return w1m, p1h, p1v, w2m, p2h, p2v, w3m, jnp.asarray(wf3)


# ---------------------------------------------------------------------------
# Independent pure-JAX reference.
# ---------------------------------------------------------------------------
def _avg_pool2(x_nhwc):
    B, H, W, C = x_nhwc.shape
    return x_nhwc.reshape(B, H // 2, 2, W // 2, 2, C).mean(axis=(2, 4))


def reference_forward(x_nchw, params):
    w1, w2, w3, wf = params
    x = jnp.transpose(x_nchw, (0, 2, 3, 1))

    def conv(a, wflat, k):
        w = wflat.reshape(k, k, a.shape[-1], -1)   # HWIO, matches (kh, kw, cin) order
        return jax.lax.conv_general_dilated(
            a, w, (1, 1), 'VALID',
            dimension_numbers=('NHWC', 'HWIO', 'NHWC'))

    h = _avg_pool2(jnp.maximum(conv(x, w1, 5), 0.0))
    h = _avg_pool2(jnp.maximum(conv(h, w2, 3), 0.0))
    h = jnp.maximum(conv(h, w3, 3), 0.0)
    flat = h.reshape(x.shape[0], -1)               # NHWC flatten (matches wf row order)
    return flat @ wf


if __name__ == "__main__":
    key = jax.random.PRNGKey(0)
    kx, kp = jax.random.split(key)

    B, CHANNEL = 2, 8
    x = jax.random.normal(kx, (B, 3, 32, 32), jnp.float32)
    params = init_params(kp, channel=CHANNEL, scale=1)
    lowered = prepare_params(params, channel=CHANNEL, scale=1)

    fwd = jax.jit(testfull_forward)
    out = jax.block_until_ready(fwd(x, lowered))

    ref = reference_forward(x, params)
    assert out.shape == (B, OUT)
    assert jnp.allclose(out, ref, atol=2e-3, rtol=2e-3), \
        float(jnp.max(jnp.abs(out - ref)))

    print("KERNEL_OK")
</pallas_src>

<mosaic_0001>
module attributes {stable_mosaic.version = 11 : i64} {
  func.func @testfull_kernel(%arg0: i32, %arg1: memref<1x32x96xf32, #tpu.memory_space<vmem>>, %arg2: memref<5x96x224xf32, #tpu.memory_space<vmem>>, %arg3: memref<224x112xf32, #tpu.memory_space<vmem>>, %arg4: memref<14x28xf32, #tpu.memory_space<vmem>>, %arg5: memref<3x112x96xf32, #tpu.memory_space<vmem>>, %arg6: memref<96x48xf32, #tpu.memory_space<vmem>>, %arg7: memref<6x12xf32, #tpu.memory_space<vmem>>, %arg8: memref<3x48x32xf32, #tpu.memory_space<vmem>>, %arg9: memref<4x32x128xf32, #tpu.memory_space<vmem>>, %arg10: memref<1x1x128xf32, #tpu.memory_space<vmem>>, %arg11: memref<14x112xf32, #tpu.memory_space<vmem>>, %arg12: memref<6x48xf32, #tpu.memory_space<vmem>>, %arg13: memref<4x32xf32, #tpu.memory_space<vmem>>) attributes {dimension_semantics = [#tpu.dimension_semantics<parallel>], iteration_bounds = array<i64: 2>, scalar_prefetch = 0 : i64, scratch_operands = 3 : i64, tpu.core_type = #tpu.core_type<tc>, window_params = [{transform_indices = @transform_0, window_bounds = array<i64: 1, 32, 96>}, {pipeline_mode = #tpu.pipeline_mode<synchronous>, transform_indices = @transform_1, window_bounds = array<i64: 5, 96, 224>}, {pipeline_mode = #tpu.pipeline_mode<synchronous>, transform_indices = @transform_2, window_bounds = array<i64: 224, 112>}, {pipeline_mode = #tpu.pipeline_mode<synchronous>, transform_indices = @transform_3, window_bounds = array<i64: 14, 28>}, {pipeline_mode = #tpu.pipeline_mode<synchronous>, transform_indices = @transform_4, window_bounds = array<i64: 3, 112, 96>}, {pipeline_mode = #tpu.pipeline_mode<synchronous>, transform_indices = @transform_5, window_bounds = array<i64: 96, 48>}, {pipeline_mode = #tpu.pipeline_mode<synchronous>, transform_indices = @transform_6, window_bounds = array<i64: 6, 12>}, {pipeline_mode = #tpu.pipeline_mode<synchronous>, transform_indices = @transform_7, window_bounds = array<i64: 3, 48, 32>}, {pipeline_mode = #tpu.pipeline_mode<synchronous>, transform_indices = @transform_8, window_bounds = array<i64: 4, 32, 128>}, {transform_indices = @transform_9, window_bounds = array<i64: 1, 1, 128>}]} {
    %c0 = arith.constant 0 : index
    %c0_0 = arith.constant 0 : index
    %c0_1 = arith.constant 0 : index
    %0 = vector.load %arg1[%c0, %c0_0, %c0_1] : memref<1x32x96xf32, #tpu.memory_space<vmem>>, vector<1x28x96xf32>
    %1 = vector.shape_cast %0 : vector<1x28x96xf32> to vector<28x96xf32>
    %c0_2 = arith.constant 0 : index
    %c0_3 = arith.constant 0 : index
    %c0_4 = arith.constant 0 : index
    %2 = vector.load %arg2[%c0_2, %c0_3, %c0_4] : memref<5x96x224xf32, #tpu.memory_space<vmem>>, vector<1x96x224xf32>
    %3 = vector.shape_cast %2 : vector<1x96x224xf32> to vector<96x224xf32>
    %cst = arith.constant dense<0.000000e+00> : vector<28x224xf32>
    %4 = tpu.matmul %1, %3, %cst {dimension_numbers = #tpu.dot_dimension_numbers<[1], [0], [0], [1], [0, 0, 1, 1], [], []>} : vector<28x96xf32>, vector<96x224xf32>, vector<28x224xf32> -> vector<28x224xf32>
    %c0_5 = arith.constant 0 : index
    %c1 = arith.constant 1 : index
    %c0_6 = arith.constant 0 : index
    %5 = vector.load %arg1[%c0_5, %c1, %c0_6] : memref<1x32x96xf32, #tpu.memory_space<vmem>>, vector<1x28x96xf32>
    %6 = vector.shape_cast %5 : vector<1x28x96xf32> to vector<28x96xf32>
    %c1_7 = arith.constant 1 : index
    %c0_8 = arith.constant 0 : index
    %c0_9 = arith.constant 0 : index
    %7 = vector.load %arg2[%c1_7, %c0_8, %c0_9] : memref<5x96x224xf32, #tpu.memory_space<vmem>>, vector<1x96x224xf32>
    %8 = vector.shape_cast %7 : vector<1x96x224xf32> to vector<96x224xf32>
    %cst_10 = arith.constant dense<0.000000e+00> : vector<28x224xf32>
    %9 = tpu.matmul %6, %8, %cst_10 {dimension_numbers = #tpu.dot_dimension_numbers<[1], [0], [0], [1], [0, 0, 1, 1], [], []>} : vector<28x96xf32>, vector<96x224xf32>, vector<28x224xf32> -> vector<28x224xf32>
    %10 = arith.addf %4, %9 : vector<28x224xf32>
    %c0_11 = arith.constant 0 : index
    %c2 = arith.constant 2 : index
    %c0_12 = arith.constant 0 : index
    %11 = vector.load %arg1[%c0_11, %c2, %c0_12] : memref<1x32x96xf32, #tpu.memory_space<vmem>>, vector<1x28x96xf32>
    %12 = vector.shape_cast %11 : vector<1x28x96xf32> to vector<28x96xf32>
    %c2_13 = arith.constant 2 : index
    %c0_14 = arith.constant 0 : index
    %c0_15 = arith.constant 0 : index
    %13 = vector.load %arg2[%c2_13, %c0_14, %c0_15] : memref<5x96x224xf32, #tpu.memory_space<vmem>>, vector<1x96x224xf32>
    %14 = vector.shape_cast %13 : vector<1x96x224xf32> to vector<96x224xf32>
    %cst_16 = arith.constant dense<0.000000e+00> : vector<28x224xf32>
    %15 = tpu.matmul %12, %14, %cst_16 {dimension_numbers = #tpu.dot_dimension_numbers<[1], [0], [0], [1], [0, 0, 1, 1], [], []>} : vector<28x96xf32>, vector<96x224xf32>, vector<28x224xf32> -> vector<28x224xf32>
    %16 = arith.addf %10, %15 : vector<28x224xf32>
    %c0_17 = arith.constant 0 : index
    %c3 = arith.constant 3 : index
    %c0_18 = arith.constant 0 : index
    %17 = vector.load %arg1[%c0_17, %c3, %c0_18] : memref<1x32x96xf32, #tpu.memory_space<vmem>>, vector<1x28x96xf32>
    %18 = vector.shape_cast %17 : vector<1x28x96xf32> to vector<28x96xf32>
    %c3_19 = arith.constant 3 : index
    %c0_20 = arith.constant 0 : index
    %c0_21 = arith.constant 0 : index
    %19 = vector.load %arg2[%c3_19, %c0_20, %c0_21] : memref<5x96x224xf32, #tpu.memory_space<vmem>>, vector<1x96x224xf32>
    %20 = vector.shape_cast %19 : vector<1x96x224xf32> to vector<96x224xf32>
    %cst_22 = arith.constant dense<0.000000e+00> : vector<28x224xf32>
    %21 = tpu.matmul %18, %20, %cst_22 {dimension_numbers = #tpu.dot_dimension_numbers<[1], [0], [0], [1], [0, 0, 1, 1], [], []>} : vector<28x96xf32>, vector<96x224xf32>, vector<28x224xf32> -> vector<28x224xf32>
    %22 = arith.addf %16, %21 : vector<28x224xf32>
    %c0_23 = arith.constant 0 : index
    %c4 = arith.constant 4 : index
    %c0_24 = arith.constant 0 : index
    %23 = vector.load %arg1[%c0_23, %c4, %c0_24] : memref<1x32x96xf32, #tpu.memory_space<vmem>>, vector<1x28x96xf32>
    %24 = vector.shape_cast %23 : vector<1x28x96xf32> to vector<28x96xf32>
    %c4_25 = arith.constant 4 : index
    %c0_26 = arith.constant 0 : index
    %c0_27 = arith.constant 0 : index
    %25 = vector.load %arg2[%c4_25, %c0_26, %c0_27] : memref<5x96x224xf32, #tpu.memory_space<vmem>>, vector<1x96x224xf32>
    %26 = vector.shape_cast %25 : vector<1x96x224xf32> to vector<96x224xf32>
    %cst_28 = arith.constant dense<0.000000e+00> : vector<28x224xf32>
    %27 = tpu.matmul %24, %26, %cst_28 {dimension_numbers = #tpu.dot_dimension_numbers<[1], [0], [0], [1], [0, 0, 1, 1], [], []>} : vector<28x96xf32>, vector<96x224xf32>, vector<28x224xf32> -> vector<28x224xf32>
    %28 = arith.addf %22, %27 : vector<28x224xf32>
    %cst_29 = arith.constant 0.000000e+00 : f32
    %29 = vector.broadcast %cst_29 : f32 to vector<28x224xf32>
    %30 = arith.maximumf %28, %29 : vector<28x224xf32>
    %c0_30 = arith.constant 0 : index
    %c0_31 = arith.constant 0 : index
    %31 = vector.load %arg4[%c0_30, %c0_31] : memref<14x28xf32, #tpu.memory_space<vmem>>, vector<14x28xf32>
    %c0_32 = arith.constant 0 : index
    %c0_33 = arith.constant 0 : index
    %32 = vector.load %arg3[%c0_32, %c0_33] : memref<224x112xf32, #tpu.memory_space<vmem>>, vector<224x112xf32>
    %cst_34 = arith.constant dense<0.000000e+00> : vector<28x112xf32>
    %33 = tpu.matmul %30, %32, %cst_34 {dimension_numbers = #tpu.dot_dimension_numbers<[1], [0], [0], [1], [0, 0, 1, 1], [], []>} : vector<28x224xf32>, vector<224x112xf32>, vector<28x112xf32> -> vector<28x112xf32>
    %cst_35 = arith.constant dense<0.000000e+00> : vector<14x112xf32>
    %34 = tpu.matmul %31, %33, %cst_35 {dimension_numbers = #tpu.dot_dimension_numbers<[1], [0], [0], [1], [0, 0, 1, 1], [], []>} : vector<14x28xf32>, vector<28x112xf32>, vector<14x112xf32> -> vector<14x112xf32>
    %c0_36 = arith.constant 0 : index
    %c0_37 = arith.constant 0 : index
    %35 = vector.load %arg11[%c0_36, %c0_37] : memref<14x112xf32, #tpu.memory_space<vmem>>, vector<14x112xf32>
    tpu.vector_store %arg11[%c0_36, %c0_37], %34 {strides = array<i32>} : memref<14x112xf32, #tpu.memory_space<vmem>>, vector<14x112xf32>,
    %c0_38 = arith.constant 0 : index
    %c0_39 = arith.constant 0 : index
    %36 = vector.load %arg11[%c0_38, %c0_39] : memref<14x112xf32, #tpu.memory_space<vmem>>, vector<12x112xf32>
    %c0_40 = arith.constant 0 : index
    %c0_41 = arith.constant 0 : index
    %c0_42 = arith.constant 0 : index
    %37 = vector.load %arg5[%c0_40, %c0_41, %c0_42] : memref<3x112x96xf32, #tpu.memory_space<vmem>>, vector<1x112x96xf32>
    %38 = vector.shape_cast %37 : vector<1x112x96xf32> to vector<112x96xf32>
    %cst_43 = arith.constant dense<0.000000e+00> : vector<12x96xf32>
    %39 = tpu.matmul %36, %38, %cst_43 {dimension_numbers = #tpu.dot_dimension_numbers<[1], [0], [0], [1], [0, 0, 1, 1], [], []>} : vector<12x112xf32>, vector<112x96xf32>, vector<12x96xf32> -> vector<12x96xf32>
    %c1_44 = arith.constant 1 : index
    %c0_45 = arith.constant 0 : index
    %40 = vector.load %arg11[%c1_44, %c0_45] : memref<14x112xf32, #tpu.memory_space<vmem>>, vector<12x112xf32>
    %c1_46 = arith.constant 1 : index
    %c0_47 = arith.constant 0 : index
    %c0_48 = arith.constant 0 : index
    %41 = vector.load %arg5[%c1_46, %c0_47, %c0_48] : memref<3x112x96xf32, #tpu.memory_space<vmem>>, vector<1x112x96xf32>
    %42 = vector.shape_cast %41 : vector<1x112x96xf32> to vector<112x96xf32>
    %cst_49 = arith.constant dense<0.000000e+00> : vector<12x96xf32>
    %43 = tpu.matmul %40, %42, %cst_49 {dimension_numbers = #tpu.dot_dimension_numbers<[1], [0], [0], [1], [0, 0, 1, 1], [], []>} : vector<12x112xf32>, vector<112x96xf32>, vector<12x96xf32> -> vector<12x96xf32>
    %44 = arith.addf %39, %43 : vector<12x96xf32>
    %c2_50 = arith.constant 2 : index
    %c0_51 = arith.constant 0 : index
    %45 = vector.load %arg11[%c2_50, %c0_51] : memref<14x112xf32, #tpu.memory_space<vmem>>, vector<12x112xf32>
    %c2_52 = arith.constant 2 : index
    %c0_53 = arith.constant 0 : index
    %c0_54 = arith.constant 0 : index
    %46 = vector.load %arg5[%c2_52, %c0_53, %c0_54] : memref<3x112x96xf32, #tpu.memory_space<vmem>>, vector<1x112x96xf32>
    %47 = vector.shape_cast %46 : vector<1x112x96xf32> to vector<112x96xf32>
    %cst_55 = arith.constant dense<0.000000e+00> : vector<12x96xf32>
    %48 = tpu.matmul %45, %47, %cst_55 {dimension_numbers = #tpu.dot_dimension_numbers<[1], [0], [0], [1], [0, 0, 1, 1], [], []>} : vector<12x112xf32>, vector<112x96xf32>, vector<12x96xf32> -> vector<12x96xf32>
    %49 = arith.addf %44, %48 : vector<12x96xf32>
    %cst_56 = arith.constant 0.000000e+00 : f32
    %50 = vector.broadcast %cst_56 : f32 to vector<12x96xf32>
    %51 = arith.maximumf %49, %50 : vector<12x96xf32>
    %c0_57 = arith.constant 0 : index
    %c0_58 = arith.constant 0 : index
    %52 = vector.load %arg7[%c0_57, %c0_58] : memref<6x12xf32, #tpu.memory_space<vmem>>, vector<6x12xf32>
    %c0_59 = arith.constant 0 : index
    %c0_60 = arith.constant 0 : index
    %53 = vector.load %arg6[%c0_59, %c0_60] : memref<96x48xf32, #tpu.memory_space<vmem>>, vector<96x48xf32>
    %cst_61 = arith.constant dense<0.000000e+00> : vector<12x48xf32>
    %54 = tpu.matmul %51, %53, %cst_61 {dimension_numbers = #tpu.dot_dimension_numbers<[1], [0], [0], [1], [0, 0, 1, 1], [], []>} : vector<12x96xf32>, vector<96x48xf32>, vector<12x48xf32> -> vector<12x48xf32>
    %cst_62 = arith.constant dense<0.000000e+00> : vector<6x48xf32>
    %55 = tpu.matmul %52, %54, %cst_62 {dimension_numbers = #tpu.dot_dimension_numbers<[1], [0], [0], [1], [0, 0, 1, 1], [], []>} : vector<6x12xf32>, vector<12x48xf32>, vector<6x48xf32> -> vector<6x48xf32>
    %c0_63 = arith.constant 0 : index
    %c0_64 = arith.constant 0 : index
    %56 = vector.load %arg12[%c0_63, %c0_64] : memref<6x48xf32, #tpu.memory_space<vmem>>, vector<6x48xf32>
    tpu.vector_store %arg12[%c0_63, %c0_64], %55 {strides = array<i32>} : memref<6x48xf32, #tpu.memory_space<vmem>>, vector<6x48xf32>,
    %c0_65 = arith.constant 0 : index
    %c0_66 = arith.constant 0 : index
    %57 = vector.load %arg12[%c0_65, %c0_66] : memref<6x48xf32, #tpu.memory_space<vmem>>, vector<4x48xf32>
    %c0_67 = arith.constant 0 : index
    %c0_68 = arith.constant 0 : index
    %c0_69 = arith.constant 0 : index
    %58 = vector.load %arg8[%c0_67, %c0_68, %c0_69] : memref<3x48x32xf32, #tpu.memory_space<vmem>>, vector<1x48x32xf32>
    %59 = vector.shape_cast %58 : vector<1x48x32xf32> to vector<48x32xf32>
    %cst_70 = arith.constant dense<0.000000e+00> : vector<4x32xf32>
    %60 = tpu.matmul %57, %59, %cst_70 {dimension_numbers = #tpu.dot_dimension_numbers<[1], [0], [0], [1], [0, 0, 1, 1], [], []>} : vector<4x48xf32>, vector<48x32xf32>, vector<4x32xf32> -> vector<4x32xf32>
    %c1_71 = arith.constant 1 : index
    %c0_72 = arith.constant 0 : index
    %61 = vector.load %arg12[%c1_71, %c0_72] : memref<6x48xf32, #tpu.memory_space<vmem>>, vector<4x48xf32>
    %c1_73 = arith.constant 1 : index
    %c0_74 = arith.constant 0 : index
    %c0_75 = arith.constant 0 : index
    %62 = vector.load %arg8[%c1_73, %c0_74, %c0_75] : memref<3x48x32xf32, #tpu.memory_space<vmem>>, vector<1x48x32xf32>
    %63 = vector.shape_cast %62 : vector<1x48x32xf32> to vector<48x32xf32>
    %cst_76 = arith.constant dense<0.000000e+00> : vector<4x32xf32>
    %64 = tpu.matmul %61, %63, %cst_76 {dimension_numbers = #tpu.dot_dimension_numbers<[1], [0], [0], [1], [0, 0, 1, 1], [], []>} : vector<4x48xf32>, vector<48x32xf32>, vector<4x32xf32> -> vector<4x32xf32>
    %65 = arith.addf %60, %64 : vector<4x32xf32>
    %c2_77 = arith.constant 2 : index
    %c0_78 = arith.constant 0 : index
    %66 = vector.load %arg12[%c2_77, %c0_78] : memref<6x48xf32, #tpu.memory_space<vmem>>, vector<4x48xf32>
    %c2_79 = arith.constant 2 : index
    %c0_80 = arith.constant 0 : index
    %c0_81 = arith.constant 0 : index
    %67 = vector.load %arg8[%c2_79, %c0_80, %c0_81] : memref<3x48x32xf32, #tpu.memory_space<vmem>>, vector<1x48x32xf32>
    %68 = vector.shape_cast %67 : vector<1x48x32xf32> to vector<48x32xf32>
    %cst_82 = arith.constant dense<0.000000e+00> : vector<4x32xf32>
    %69 = tpu.matmul %66, %68, %cst_82 {dimension_numbers = #tpu.dot_dimension_numbers<[1], [0], [0], [1], [0, 0, 1, 1], [], []>} : vector<4x48xf32>, vector<48x32xf32>, vector<4x32xf32> -> vector<4x32xf32>
    %70 = arith.addf %65, %69 : vector<4x32xf32>
    %cst_83 = arith.constant 0.000000e+00 : f32
    %71 = vector.broadcast %cst_83 : f32 to vector<4x32xf32>
    %72 = arith.maximumf %70, %71 : vector<4x32xf32>
    %c0_84 = arith.constant 0 : index
    %c0_85 = arith.constant 0 : index
    %73 = vector.load %arg13[%c0_84, %c0_85] : memref<4x32xf32, #tpu.memory_space<vmem>>, vector<4x32xf32>
    tpu.vector_store %arg13[%c0_84, %c0_85], %72 {strides = array<i32>} : memref<4x32xf32, #tpu.memory_space<vmem>>, vector<4x32xf32>,
    %c0_86 = arith.constant 0 : index
    %c0_87 = arith.constant 0 : index
    %74 = vector.load %arg13[%c0_86, %c0_87] : memref<4x32xf32, #tpu.memory_space<vmem>>, vector<1x32xf32>
    %c0_88 = arith.constant 0 : index
    %c0_89 = arith.constant 0 : index
    %c0_90 = arith.constant 0 : index
    %75 = vector.load %arg9[%c0_88, %c0_89, %c0_90] : memref<4x32x128xf32, #tpu.memory_space<vmem>>, vector<1x32x128xf32>
    %76 = vector.shape_cast %75 : vector<1x32x128xf32> to vector<32x128xf32>
    %cst_91 = arith.constant dense<0.000000e+00> : vector<1x128xf32>
    %77 = tpu.matmul %74, %76, %cst_91 {dimension_numbers = #tpu.dot_dimension_numbers<[1], [0], [0], [1], [0, 0, 1, 1], [], []>} : vector<1x32xf32>, vector<32x128xf32>, vector<1x128xf32> -> vector<1x128xf32>
    %c1_92 = arith.constant 1 : index
    %c0_93 = arith.constant 0 : index
    %78 = vector.load %arg13[%c1_92, %c0_93] : memref<4x32xf32, #tpu.memory_space<vmem>>, vector<1x32xf32>
    %c1_94 = arith.constant 1 : index
    %c0_95 = arith.constant 0 : index
    %c0_96 = arith.constant 0 : index
    %79 = vector.load %arg9[%c1_94, %c0_95, %c0_96] : memref<4x32x128xf32, #tpu.memory_space<vmem>>, vector<1x32x128xf32>
    %80 = vector.shape_cast %79 : vector<1x32x128xf32> to vector<32x128xf32>
    %cst_97 = arith.constant dense<0.000000e+00> : vector<1x128xf32>
    %81 = tpu.matmul %78, %80, %cst_97 {dimension_numbers = #tpu.dot_dimension_numbers<[1], [0], [0], [1], [0, 0, 1, 1], [], []>} : vector<1x32xf32>, vector<32x128xf32>, vector<1x128xf32> -> vector<1x128xf32>
    %82 = arith.addf %77, %81 : vector<1x128xf32>
    %c2_98 = arith.constant 2 : index
    %c0_99 = arith.constant 0 : index
    %83 = vector.load %arg13[%c2_98, %c0_99] : memref<4x32xf32, #tpu.memory_space<vmem>>, vector<1x32xf32>
    %c2_100 = arith.constant 2 : index
    %c0_101 = arith.constant 0 : index
    %c0_102 = arith.constant 0 : index
    %84 = vector.load %arg9[%c2_100, %c0_101, %c0_102] : memref<4x32x128xf32, #tpu.memory_space<vmem>>, vector<1x32x128xf32>
    %85 = vector.shape_cast %84 : vector<1x32x128xf32> to vector<32x128xf32>
    %cst_103 = arith.constant dense<0.000000e+00> : vector<1x128xf32>
    %86 = tpu.matmul %83, %85, %cst_103 {dimension_numbers = #tpu.dot_dimension_numbers<[1], [0], [0], [1], [0, 0, 1, 1], [], []>} : vector<1x32xf32>, vector<32x128xf32>, vector<1x128xf32> -> vector<1x128xf32>
    %87 = arith.addf %82, %86 : vector<1x128xf32>
    %c3_104 = arith.constant 3 : index
    %c0_105 = arith.constant 0 : index
    %88 = vector.load %arg13[%c3_104, %c0_105] : memref<4x32xf32, #tpu.memory_space<vmem>>, vector<1x32xf32>
    %c3_106 = arith.constant 3 : index
    %c0_107 = arith.constant 0 : index
    %c0_108 = arith.constant 0 : index
    %89 = vector.load %arg9[%c3_106, %c0_107, %c0_108] : memref<4x32x128xf32, #tpu.memory_space<vmem>>, vector<1x32x128xf32>
    %90 = vector.shape_cast %89 : vector<1x32x128xf32> to vector<32x128xf32>
    %cst_109 = arith.constant dense<0.000000e+00> : vector<1x128xf32>
    %91 = tpu.matmul %88, %90, %cst_109 {dimension_numbers = #tpu.dot_dimension_numbers<[1], [0], [0], [1], [0, 0, 1, 1], [], []>} : vector<1x32xf32>, vector<32x128xf32>, vector<1x128xf32> -> vector<1x128xf32>
    %92 = arith.addf %87, %91 : vector<1x128xf32>
    %c0_110 = arith.constant 0 : index
    %c0_111 = arith.constant 0 : index
    %c0_112 = arith.constant 0 : index
    %93 = vector.load %arg10[%c0_110, %c0_111, %c0_112] : memref<1x1x128xf32, #tpu.memory_space<vmem>>, vector<1x1x128xf32>
    %94 = vector.shape_cast %93 : vector<1x1x128xf32> to vector<1x128xf32>
    %95 = vector.shape_cast %92 : vector<1x128xf32> to vector<1x1x128xf32>
    tpu.vector_store %arg10[%c0_110, %c0_111, %c0_112], %95 {strides = array<i32>} : memref<1x1x128xf32, #tpu.memory_space<vmem>>, vector<1x1x128xf32>,
    return
  }
  func.func @transform_0(%arg0: i32) -> (i32, i32, i32) {
    %c0_i32 = arith.constant 0 : i32
    %c0_i32_0 = arith.constant 0 : i32
    %c0_i32_1 = arith.constant 0 : i32
    return %arg0, %c0_i32, %c0_i32_0 : i32, i32, i32
  }
  func.func @transform_1(%arg0: i32) -> (i32, i32, i32) {
    %c0_i32 = arith.constant 0 : i32
    %c0_i32_0 = arith.constant 0 : i32
    %c0_i32_1 = arith.constant 0 : i32
    %c0_i32_2 = arith.constant 0 : i32
    return %c0_i32, %c0_i32_0, %c0_i32_1 : i32, i32, i32
  }
  func.func @transform_2(%arg0: i32) -> (i32, i32) {
    %c0_i32 = arith.constant 0 : i32
    %c0_i32_0 = arith.constant 0 : i32
    %c0_i32_1 = arith.constant 0 : i32
    return %c0_i32, %c0_i32_0 : i32, i32
  }
  func.func @transform_3(%arg0: i32) -> (i32, i32) {
    %c0_i32 = arith.constant 0 : i32
    %c0_i32_0 = arith.constant 0 : i32
    %c0_i32_1 = arith.constant 0 : i32
    return %c0_i32, %c0_i32_0 : i32, i32
  }
  func.func @transform_4(%arg0: i32) -> (i32, i32, i32) {
    %c0_i32 = arith.constant 0 : i32
    %c0_i32_0 = arith.constant 0 : i32
    %c0_i32_1 = arith.constant 0 : i32
    %c0_i32_2 = arith.constant 0 : i32
    return %c0_i32, %c0_i32_0, %c0_i32_1 : i32, i32, i32
  }
  func.func @transform_5(%arg0: i32) -> (i32, i32) {
    %c0_i32 = arith.constant 0 : i32
    %c0_i32_0 = arith.constant 0 : i32
    %c0_i32_1 = arith.constant 0 : i32
    return %c0_i32, %c0_i32_0 : i32, i32
  }
  func.func @transform_6(%arg0: i32) -> (i32, i32) {
    %c0_i32 = arith.constant 0 : i32
    %c0_i32_0 = arith.constant 0 : i32
    %c0_i32_1 = arith.constant 0 : i32
    return %c0_i32, %c0_i32_0 : i32, i32
  }
  func.func @transform_7(%arg0: i32) -> (i32, i32, i32) {
    %c0_i32 = arith.constant 0 : i32
    %c0_i32_0 = arith.constant 0 : i32
    %c0_i32_1 = arith.constant 0 : i32
    %c0_i32_2 = arith.constant 0 : i32
    return %c0_i32, %c0_i32_0, %c0_i32_1 : i32, i32, i32
  }
  func.func @transform_8(%arg0: i32) -> (i32, i32, i32) {
    %c0_i32 = arith.constant 0 : i32
    %c0_i32_0 = arith.constant 0 : i32
    %c0_i32_1 = arith.constant 0 : i32
    %c0_i32_2 = arith.constant 0 : i32
    return %c0_i32, %c0_i32_0, %c0_i32_1 : i32, i32, i32
  }
  func.func @transform_9(%arg0: i32) -> (i32, i32, i32) {
    %c0_i32 = arith.constant 0 : i32
    %c0_i32_0 = arith.constant 0 : i32
    %c0_i32_1 = arith.constant 0 : i32
    return %arg0, %c0_i32, %c0_i32_0 : i32, i32, i32
  }
}

</mosaic_0001>

<llo_original>
// kernel: testfull_forward.1
$region0: #{testfull_forward.1}
  #allocation0 [shape = 'u32[]', space=smem, size = 0x4, offset = 0x4, fixed_abs, tag = 'smem constant byte address 0x4 - core index']
  #allocation1 [shape = 'u32[144,128]{1,0:T(1,128)}', space=vmem, size = 0x12000, scoped, tag = 'internal scratch']
  #allocation2 [shape = 'f32[14,112]{1,0:T(8,128)}', space=vmem, size = 0x2000, scoped, tag = 'scratch operand']
  #allocation3 [shape = 'f32[6,48]{1,0:T(8,128)}', space=vmem, size = 0x1000, scoped, tag = 'scratch operand']
  #allocation4 [shape = 'f32[4,32]{1,0:T(4,128)}', space=vmem, size = 0x800, scoped, tag = 'scratch operand']
  %s0 = inlined_call_operand.vmem [shape: f32[2,32,96], index: 0, kind: input, shape index: {}]
  %s1 = inlined_call_operand.vmem [shape: f32[5,96,224], index: 1, kind: input, shape index: {}]
  %s2 = inlined_call_operand.vmem [shape: f32[224,112], index: 2, kind: input, shape index: {}]
  %s3 = inlined_call_operand.vmem [shape: f32[14,28], index: 3, kind: input, shape index: {}]
  %s4 = inlined_call_operand.vmem [shape: f32[3,112,96], index: 4, kind: input, shape index: {}]
  %s5 = inlined_call_operand.vmem [shape: f32[96,48], index: 5, kind: input, shape index: {}]
  %s6 = inlined_call_operand.vmem [shape: f32[6,12], index: 6, kind: input, shape index: {}]
  %s7 = inlined_call_operand.vmem [shape: f32[3,48,32], index: 7, kind: input, shape index: {}]
  %s8 = inlined_call_operand.vmem [shape: f32[4,32,128], index: 8, kind: input, shape index: {}]
  %s9 = inlined_call_operand.hbm [shape: f32[2,1,128], index: 9, kind: output, shape index: {}]
  %s10 = sld [smem:[#allocation0]]
  $region69: #{testfull_forward.1} parent=0
    _
  %s12 = ssub.s32 1, %s10
  %s13 = scalar_select 0, %s12, %s10
  $region1: #{testfull_forward.1} parent=0
    #allocation5 [shape = 'u8[1024]{0}', space=vmem, size = 0x400, scoped, tag = 'output window, operand 0']
    #allocation6 [shape = 's32[2]{0}', space=sflag, size = 0x8, scoped, tag = 'scoped memory for testfull_forward.1']
    %14 = vsyncpa [#allocation6], 0
    %s15 = scalar_lea.sflag [#allocation6], 1
    %16 = vsyncpa %s15, 0
    loop: start=0, step=1, limit=4
    $region2: #{testfull_forward.1} parent=1 // loop_pre_header
      _
    $region3: #{testfull_forward.1} parent=1 // loop_header
      %s18 = sphi 0, %s22
      %p19 = scmp.ge.s32.totalorder %s18, 4
      %s28 = sphi 0, %s30
      %s31 = sphi 0, %s28
      %s32 = sphi 0, %s31
      %s48 = sphi 0, %s32
      %s52 = sphi 0, %s52
      %s54 = sphi 0, %s52
      %s55 = sphi 0, %s54
      %s69 = sphi 0, %s55
      %s73 = sphi 0, %s73
      %s75 = sphi 0, %s73
      %s76 = sphi 0, %s75
      %s90 = sphi 0, %s76
      %s94 = sphi 0, %s94
      %s96 = sphi 0, %s94
      %s97 = sphi 0, %s96
      %s111 = sphi 0, %s97
      %s115 = sphi 0, %s115
      %s117 = sphi 0, %s115
      %s118 = sphi 0, %s117
      %s132 = sphi 0, %s118
      %s136 = sphi 0, %s136
      %s138 = sphi 0, %s136
      %s139 = sphi 0, %s138
      %s153 = sphi 0, %s139
      %s157 = sphi 0, %s157
      %s159 = sphi 0, %s157
      %s160 = sphi 0, %s159
      %s174 = sphi 0, %s160
      %s178 = sphi 0, %s178
      %s180 = sphi 0, %s178
      %s181 = sphi 0, %s180
      %s195 = sphi 0, %s181
      %s199 = sphi 0, %s199
      %s201 = sphi 0, %s199
      %s202 = sphi 0, %s201
      %s216 = sphi 0, %s202
      %s222 = sphi 0, %s224
      %s225 = sphi 0, %s222
      %s226 = sphi 0, %s225
      %s242 = sphi 0, %s226
    $region4: #{testfull_forward.1} parent=1 // loop_header_branch
      %21 = sbr.rel (%p19) target = $region8
    $region5: #{testfull_forward.1} parent=1 // loop_body
      %s23 = ssub.s32 %s18, 1
      %s24 = ssub.s32 %s18, 2
      %s25 = sadd.s32 %s18, 1
      %s26 = ssub.s32 %s18, %s25
      %p27 = scmp.eq.s32.totalorder %s26, 0
      %s29 = sadd.s32 %s28, 1
      %s30 = scalar_select %p27, %s28, %s29
      %p33 = pneg %p27
      %p34 = scmp.eq.s32.totalorder %s18, 1
      %p35 = por %p33, %p34
      %p36 = scmp.ne.s32.totalorder %s28, %s31
      %p37 = scmp.eq.s32.totalorder %s18, 0
      %p38 = por %p36, %p37
      %p39 = scmp.ne.s32.totalorder %s28, %s31
      %p40 = scmp.eq.s32.totalorder %s23, 1
      %p41 = por %p39, %p40
      %p42 = scmp.ne.s32.totalorder %s31, %s32
      %p43 = scmp.eq.s32.totalorder %s23, 0
      %p44 = por %p42, %p43
      %p45 = scmp.ne.s32.totalorder %s31, %s32
      %p46 = scmp.eq.s32.totalorder %s24, 1
      %p47 = por %p45, %p46
      %p49 = scmp.ne.s32.totalorder %s32, %s48
      %p50 = scmp.eq.s32.totalorder %s24, 0
      %p51 = por %p49, %p50
      %s53 = sadd.s32 %s52, 1
      %p56 = scmp.eq.s32.totalorder %s18, 1
      %p57 = scmp.ne.s32.totalorder %s52, %s54
      %p58 = scmp.eq.s32.totalorder %s18, 0
      %p59 = por %p57, %p58
      %p60 = scmp.ne.s32.totalorder %s52, %s54
      %p61 = scmp.eq.s32.totalorder %s23, 1
      %p62 = por %p60, %p61
      %p63 = scmp.ne.s32.totalorder %s54, %s55
      %p64 = scmp.eq.s32.totalorder %s23, 0
      %p65 = por %p63, %p64
      %p66 = scmp.ne.s32.totalorder %s54, %s55
      %p67 = scmp.eq.s32.totalorder %s24, 1
      %p68 = por %p66, %p67
      %p70 = scmp.ne.s32.totalorder %s55, %s69
      %p71 = scmp.eq.s32.totalorder %s24, 0
      %p72 = por %p70, %p71
      %s74 = sadd.s32 %s73, 1
      %p77 = scmp.eq.s32.totalorder %s18, 1
      %p78 = scmp.ne.s32.totalorder %s73, %s75
      %p79 = scmp.eq.s32.totalorder %s18, 0
      %p80 = por %p78, %p79
      %p81 = scmp.ne.s32.totalorder %s73, %s75
      %p82 = scmp.eq.s32.totalorder %s23, 1
      %p83 = por %p81, %p82
      %p84 = scmp.ne.s32.totalorder %s75, %s76
      %p85 = scmp.eq.s32.totalorder %s23, 0
      %p86 = por %p84, %p85
      %p87 = scmp.ne.s32.totalorder %s75, %s76
      %p88 = scmp.eq.s32.totalorder %s24, 1
      %p89 = por %p87, %p88
      %p91 = scmp.ne.s32.totalorder %s76, %s90
      %p92 = scmp.eq.s32.totalorder %s24, 0
      %p93 = por %p91, %p92
      %s95 = sadd.s32 %s94, 1
      %p98 = scmp.eq.s32.totalorder %s18, 1
      %p99 = scmp.ne.s32.totalorder %s94, %s96
      %p100 = scmp.eq.s32.totalorder %s18, 0
      %p101 = por %p99, %p100
      %p102 = scmp.ne.s32.totalorder %s94, %s96
      %p103 = scmp.eq.s32.totalorder %s23, 1
      %p104 = por %p102, %p103
      %p105 = scmp.ne.s32.totalorder %s96, %s97
      %p106 = scmp.eq.s32.totalorder %s23, 0
      %p107 = por %p105, %p106
      %p108 = scmp.ne.s32.totalorder %s96, %s97
      %p109 = scmp.eq.s32.totalorder %s24, 1
      %p110 = por %p108, %p109
      %p112 = scmp.ne.s32.totalorder %s97, %s111
      %p113 = scmp.eq.s32.totalorder %s24, 0
      %p114 = por %p112, %p113
      %s116 = sadd.s32 %s115, 1
      %p119 = scmp.eq.s32.totalorder %s18, 1
      %p120 = scmp.ne.s32.totalorder %s115, %s117
      %p121 = scmp.eq.s32.totalorder %s18, 0
      %p122 = por %p120, %p121
      %p123 = scmp.ne.s32.totalorder %s115, %s117
      %p124 = scmp.eq.s32.totalorder %s23, 1
      %p125 = por %p123, %p124
      %p126 = scmp.ne.s32.totalorder %s117, %s118
      %p127 = scmp.eq.s32.totalorder %s23, 0
      %p128 = por %p126, %p127
      %p129 = scmp.ne.s32.totalorder %s117, %s118
      %p130 = scmp.eq.s32.totalorder %s24, 1
      %p131 = por %p129, %p130
      %p133 = scmp.ne.s32.totalorder %s118, %s132
      %p134 = scmp.eq.s32.totalorder %s24, 0
      %p135 = por %p133, %p134
      %s137 = sadd.s32 %s136, 1
      %p140 = scmp.eq.s32.totalorder %s18, 1
      %p141 = scmp.ne.s32.totalorder %s136, %s138
      %p142 = scmp.eq.s32.totalorder %s18, 0
      %p143 = por %p141, %p142
      %p144 = scmp.ne.s32.totalorder %s136, %s138
      %p145 = scmp.eq.s32.totalorder %s23, 1
      %p146 = por %p144, %p145
      %p147 = scmp.ne.s32.totalorder %s138, %s139
      %p148 = scmp.eq.s32.totalorder %s23, 0
      %p149 = por %p147, %p148
      %p150 = scmp.ne.s32.totalorder %s138, %s139
      %p151 = scmp.eq.s32.totalorder %s24, 1
      %p152 = por %p150, %p151
      %p154 = scmp.ne.s32.totalorder %s139, %s153
      %p155 = scmp.eq.s32.totalorder %s24, 0
      %p156 = por %p154, %p155
      %s158 = sadd.s32 %s157, 1
      %p161 = scmp.eq.s32.totalorder %s18, 1
      %p162 = scmp.ne.s32.totalorder %s157, %s159
      %p163 = scmp.eq.s32.totalorder %s18, 0
      %p164 = por %p162, %p163
      %p165 = scmp.ne.s32.totalorder %s157, %s159
      %p166 = scmp.eq.s32.totalorder %s23, 1
      %p167 = por %p165, %p166
      %p168 = scmp.ne.s32.totalorder %s159, %s160
      %p169 = scmp.eq.s32.totalorder %s23, 0
      %p170 = por %p168, %p169
      %p171 = scmp.ne.s32.totalorder %s159, %s160
      %p172 = scmp.eq.s32.totalorder %s24, 1
      %p173 = por %p171, %p172
      %p175 = scmp.ne.s32.totalorder %s160, %s174
      %p176 = scmp.eq.s32.totalorder %s24, 0
      %p177 = por %p175, %p176
      %s179 = sadd.s32 %s178, 1
      %p182 = scmp.eq.s32.totalorder %s18, 1
      %p183 = scmp.ne.s32.totalorder %s178, %s180
      %p184 = scmp.eq.s32.totalorder %s18, 0
      %p185 = por %p183, %p184
      %p186 = scmp.ne.s32.totalorder %s178, %s180
      %p187 = scmp.eq.s32.totalorder %s23, 1
      %p188 = por %p186, %p187
      %p189 = scmp.ne.s32.totalorder %s180, %s181
      %p190 = scmp.eq.s32.totalorder %s23, 0
      %p191 = por %p189, %p190
      %p192 = scmp.ne.s32.totalorder %s180, %s181
      %p193 = scmp.eq.s32.totalorder %s24, 1
      %p194 = por %p192, %p193
      %p196 = scmp.ne.s32.totalorder %s181, %s195
      %p197 = scmp.eq.s32.totalorder %s24, 0
      %p198 = por %p196, %p197
      %s200 = sadd.s32 %s199, 1
      %p203 = scmp.eq.s32.totalorder %s18, 1
      %p204 = scmp.ne.s32.totalorder %s199, %s201
      %p205 = scmp.eq.s32.totalorder %s18, 0
      %p206 = por %p204, %p205
      %p207 = scmp.ne.s32.totalorder %s199, %s201
      %p208 = scmp.eq.s32.totalorder %s23, 1
      %p209 = por %p207, %p208
      %p210 = scmp.ne.s32.totalorder %s201, %s202
      %p211 = scmp.eq.s32.totalorder %s23, 0
      %p212 = por %p210, %p211
      %p213 = scmp.ne.s32.totalorder %s201, %s202
      %p214 = scmp.eq.s32.totalorder %s24, 1
      %p215 = por %p213, %p214
      %p217 = scmp.ne.s32.totalorder %s202, %s216
      %p218 = scmp.eq.s32.totalorder %s24, 0
      %p219 = por %p217, %p218
      %s220 = ssub.s32 %s18, %s25
      %p221 = scmp.eq.s32.totalorder %s220, 0
      %s223 = sadd.s32 %s222, 1
      %s224 = scalar_select %p221, %s222, %s223
      %p227 = pneg %p221
      %p228 = scmp.eq.s32.totalorder %s18, 1
      %p229 = por %p227, %p228
      %p230 = scmp.ne.s32.totalorder %s222, %s225
      %p231 = scmp.eq.s32.totalorder %s18, 0
      %p232 = por %p230, %p231
      %p233 = scmp.ne.s32.totalorder %s222, %s225
      %p234 = scmp.eq.s32.totalorder %s23, 1
      %p235 = por %p233, %p234
      %p236 = scmp.ne.s32.totalorder %s225, %s226
      %p237 = scmp.eq.s32.totalorder %s23, 0
      %p238 = por %p236, %p237
      %p239 = scmp.ne.s32.totalorder %s225, %s226
      %p240 = scmp.eq.s32.totalorder %s24, 1
      %p241 = por %p239, %p240
      %p243 = scmp.ne.s32.totalorder %s226, %s242
      %p244 = scmp.eq.s32.totalorder %s24, 0
      %p245 = por %p243, %p244
      %p246 = scmp.le.s32.totalorder 1, %s18
      %p247 = scmp.lt.s32.totalorder %s18, 3
      %p248 = pnand %p246, %p247
      %p249 = pneg %p248
      // Predicated region
      $region9: #{testfull_forward.1} parent=5 // pred_check
        _
      $region10: #{testfull_forward.1} parent=5 // pred_check_branch
        %251 = sbr.rel (%p248) target = $region12
      $region11: #{testfull_forward.1} parent=5 // pred_region
        %s252 = ssub.s32 %s18, 1
        // Predicated region
        $region13: #{testfull_forward.1} parent=11 // pred_check
          %p253 = pneg %p65
        $region14: #{testfull_forward.1} parent=11 // pred_check_branch
          %255 = sbr.rel (%p253) target = $region16
        $region15: #{testfull_forward.1} parent=11 // pred_region
          _
        $region16: #{testfull_forward.1} parent=11 // pred_fallthru
          _
        // Predicated region
        $region17: #{testfull_forward.1} parent=11 // pred_check
          %p256 = pneg %p86
        $region18: #{testfull_forward.1} parent=11 // pred_check_branch
          %258 = sbr.rel (%p256) target = $region20
        $region19: #{testfull_forward.1} parent=11 // pred_region
          _
        $region20: #{testfull_forward.1} parent=11 // pred_fallthru
          _
        // Predicated region
        $region21: #{testfull_forward.1} parent=11 // pred_check
          %p259 = pneg %p107
        $region22: #{testfull_forward.1} parent=11 // pred_check_branch
          %261 = sbr.rel (%p259) target = $region24
        $region23: #{testfull_forward.1} parent=11 // pred_region
          _
        $region24: #{testfull_forward.1} parent=11 // pred_fallthru
          _
        // Predicated region
        $region25: #{testfull_forward.1} parent=11 // pred_check
          %p262 = pneg %p128
        $region26: #{testfull_forward.1} parent=11 // pred_check_branch
          %264 = sbr.rel (%p262) target = $region28
        $region27: #{testfull_forward.1} parent=11 // pred_region
          _
        $region28: #{testfull_forward.1} parent=11 // pred_fallthru
          _
        // Predicated region
        $region29: #{testfull_forward.1} parent=11 // pred_check
          %p265 = pneg %p149
        $region30: #{testfull_forward.1} parent=11 // pred_check_branch
          %267 = sbr.rel (%p265) target = $region32
        $region31: #{testfull_forward.1} parent=11 // pred_region
          _
        $region32: #{testfull_forward.1} parent=11 // pred_fallthru
          _
        // Predicated region
        $region33: #{testfull_forward.1} parent=11 // pred_check
          %p268 = pneg %p170
        $region34: #{testfull_forward.1} parent=11 // pred_check_branch
          %270 = sbr.rel (%p268) target = $region36
        $region35: #{testfull_forward.1} parent=11 // pred_region
          _
        $region36: #{testfull_forward.1} parent=11 // pred_fallthru
          _
        // Predicated region
        $region37: #{testfull_forward.1} parent=11 // pred_check
          %p271 = pneg %p191
        $region38: #{testfull_forward.1} parent=11 // pred_check_branch
          %273 = sbr.rel (%p271) target = $region40
        $region39: #{testfull_forward.1} parent=11 // pred_region
          _
        $region40: #{testfull_forward.1} parent=11 // pred_fallthru
          _
        // Predicated region
        $region41: #{testfull_forward.1} parent=11 // pred_check
          %p274 = pneg %p212
        $region42: #{testfull_forward.1} parent=11 // pred_check_branch
          %276 = sbr.rel (%p274) target = $region44
        $region43: #{testfull_forward.1} parent=11 // pred_region
          _
        $region44: #{testfull_forward.1} parent=11 // pred_fallthru
          _
      $region12: #{testfull_forward.1} parent=5 // pred_fallthru
        _
      %p277 = scmp.lt.s32.totalorder %s18, 2
      // Predicated region
      $region45: #{testfull_forward.1} parent=5 // pred_check
        %p278 = pneg %p277
      $region46: #{testfull_forward.1} parent=5 // pred_check_branch
        %280 = sbr.rel (%p278) target = $region48
      $region47: #{testfull_forward.1} parent=5 // pred_region
        // Predicated region
        $region49: #{testfull_forward.1} parent=47 // pred_check
          %p281 = pneg %p38
        $region50: #{testfull_forward.1} parent=47 // pred_check_branch
          %283 = sbr.rel (%p281) target = $region52
        $region51: #{testfull_forward.1} parent=47 // pred_region
          %p284 = scmp.lt.s32.totalorder %s18, 1
          %s285 = scalar_select %p284, %s18, 1
          %s286 = smul.addr %s285, 4
          %s287 = smul.addr %s286, 8
          %s288 = scalar_lea.vmem %s0, %s287
        $region52: #{testfull_forward.1} parent=47 // pred_fallthru
          _
      $region48: #{testfull_forward.1} parent=5 // pred_fallthru
        _
      %p289 = scmp.le.s32.totalorder 1, %s18
      %p290 = scmp.lt.s32.totalorder %s18, 3
      %p291 = pnand %p289, %p290
      %p292 = pneg %p291
      // Predicated region
      $region53: #{testfull_forward.1} parent=5 // pred_check
        _
      $region54: #{testfull_forward.1} parent=5 // pred_check_branch
        %294 = sbr.rel (%p291) target = $region56
      $region55: #{testfull_forward.1} parent=5 // pred_region
        %s295 = ssub.s32 %s18, 1
        %p296 = scmp.lt.s32.totalorder %s23, 1
        %s297 = scalar_select %p296, %s23, 1
        %s298 = smul.addr %s297, 4
        %s299 = smul.addr %s298, 8
        %s300 = scalar_lea.vmem %s0, %s299
        %p301 = pneg %p44
        %p302 = pneg %p41
        %p303 = pneg %p65
        %p304 = pneg %p62
        %p305 = pneg %p86
        %p306 = pneg %p83
        %p307 = pneg %p107
        %p308 = pneg %p104
        %p309 = pneg %p128
        %p310 = pneg %p125
        %p311 = pneg %p149
        %p312 = pneg %p146
        %p313 = pneg %p170
        %p314 = pneg %p167
        %p315 = pneg %p191
        %p316 = pneg %p188
        %p317 = pneg %p212
        %p318 = pneg %p209
        %p319 = pneg %p238
        %p320 = pneg %p235
        %s321 = sand.u32 %s225, 1
        %s322 = scalar_lea.sflag [#allocation6], %s321
        %s323 = sand.u32 %s225, 1
        %s324 = scalar_lea.vmem [#allocation5], %s323
        %p325 = scmp.lt.s32.totalorder %s23, 1
        %s326 = scalar_select %p325, %s23, 1
        %s327 = smul.addr %s326, 4
        %s328 = smul.addr %s327, 8
        %s329 = scalar_lea.vmem %s0, %s328
        %v330 = vld [vmem:[%s329] sm:$0xff]
        %v331 = vld [vmem:[%s329 + $0x8] sm:$0xff]
        %v332 = vld [vmem:[%s329 + $0x10] sm:$0xff]
        %v333 = vld [vmem:[%s329 + $0x18] sm:$0xf]
        %v334 = vld [vmem:[%s1] sm:$0xff]
        %v335 = vld [vmem:[%s1 + $0x8] sm:$0xff]
        %v336 = vld [vmem:[%s1 + $0x10] sm:$0xff]
        %v337 = vld [vmem:[%s1 + $0x18] sm:$0xff]
        %v338 = vld [vmem:[%s1 + $0x20] sm:$0xff]
        %v339 = vld [vmem:[%s1 + $0x28] sm:$0xff]
        %v340 = vld [vmem:[%s1 + $0x30] sm:$0xff]
        %v341 = vld [vmem:[%s1 + $0x38] sm:$0xff]
        %v342 = vld [vmem:[%s1 + $0x40] sm:$0xff]
        %v343 = vld [vmem:[%s1 + $0x48] sm:$0xff]
        %v344 = vld [vmem:[%s1 + $0x50] sm:$0xff]
        %v345 = vld [vmem:[%s1 + $0x58] sm:$0xff]
        %v346 = vld [vmem:[%s1 + $0x60] sm:$0xff]
        %v347 = vld [vmem:[%s1 + $0x68] sm:$0xff]
        %v348 = vld [vmem:[%s1 + $0x70] sm:$0xff]
        %v349 = vld [vmem:[%s1 + $0x78] sm:$0xff]
        %v350 = vld [vmem:[%s1 + $0x80] sm:$0xff]
        %v351 = vld [vmem:[%s1 + $0x88] sm:$0xff]
        %v352 = vld [vmem:[%s1 + $0x90] sm:$0xff]
        %v353 = vld [vmem:[%s1 + $0x98] sm:$0xff]
        %v354 = vld [vmem:[%s1 + $0xa0] sm:$0xff]
        %v355 = vld [vmem:[%s1 + $0xa8] sm:$0xff]
        %v356 = vld [vmem:[%s1 + $0xb0] sm:$0xff]
        %v357 = vld [vmem:[%s1 + $0xb8] sm:$0xff]
        %v358 = vld [vmem:[%s329 + $0x1] sm:$0xff]
        %v359 = vld [vmem:[%s329 + $0x9] sm:$0xff]
        %v360 = vld [vmem:[%s329 + $0x11] sm:$0xff]
        %v361 = vld [vmem:[%s329 + $0x19] sm:$0xf]
        %s362 = scalar_lea.vmem %s1, 192
        %v363 = vld [vmem:[%s362] sm:$0xff]
        %v364 = vld [vmem:[%s362 + $0x8] sm:$0xff]
        %v365 = vld [vmem:[%s362 + $0x10] sm:$0xff]
        %v366 = vld [vmem:[%s362 + $0x18] sm:$0xff]
        %v367 = vld [vmem:[%s362 + $0x20] sm:$0xff]
        %v368 = vld [vmem:[%s362 + $0x28] sm:$0xff]
        %v369 = vld [vmem:[%s362 + $0x30] sm:$0xff]
        %v370 = vld [vmem:[%s362 + $0x38] sm:$0xff]
        %v371 = vld [vmem:[%s362 + $0x40] sm:$0xff]
        %v372 = vld [vmem:[%s362 + $0x48] sm:$0xff]
        %v373 = vld [vmem:[%s362 + $0x50] sm:$0xff]
        %v374 = vld [vmem:[%s362 + $0x58] sm:$0xff]
        %v375 = vld [vmem:[%s362 + $0x60] sm:$0xff]
        %v376 = vld [vmem:[%s362 + $0x68] sm:$0xff]
        %v377 = vld [vmem:[%s362 + $0x70] sm:$0xff]
        %v378 = vld [vmem:[%s362 + $0x78] sm:$0xff]
        %v379 = vld [vmem:[%s362 + $0x80] sm:$0xff]
        %v380 = vld [vmem:[%s362 + $0x88] sm:$0xff]
        %v381 = vld [vmem:[%s362 + $0x90] sm:$0xff]
        %v382 = vld [vmem:[%s362 + $0x98] sm:$0xff]
        %v383 = vld [vmem:[%s362 + $0xa0] sm:$0xff]
        %v384 = vld [vmem:[%s362 + $0xa8] sm:$0xff]
        %v385 = vld [vmem:[%s362 + $0xb0] sm:$0xff]
        %v386 = vld [vmem:[%s362 + $0xb8] sm:$0xff]
        %vm387 = vcmask 785408
        %v389 = vsel %vm387, %v358, 0
        %v392 = vsel %vm387, %v359, 0
        %v395 = vsel %vm387, %v360, 0
        %v398 = vsel %vm387, %v361, 0
        %400 = vmatprep.subr.mxu0 %v364
        %401 = vmatpush1.msra.mxu0 %v363
        %402 = vmatprep.subr.mxu0 %v366
        %403 = vmatpush1.msra.mxu0 %v365
        %404 = vmatprep.subr.mxu0 %v368
        %405 = vmatpush1.msra.mxu0 %v367
        %406 = vmatprep.subr.mxu0 %v370
        %407 = vmatpush1.msra.mxu0 %v369
        %408 = vmatprep.subr.mxu0 %v372
        %409 = vmatpush1.msra.mxu0 %v371
        %410 = vmatprep.subr.mxu0 %v374
        %411 = vmatpush1.msra.mxu0 %v373
        %412 = vmatprep.subr.mxu0 %v376
        %413 = vmatpush1.msra.mxu0 %v375
        %414 = vmatprep.subr.mxu0 %v378
        %415 = vmatpush1.msra.mxu0 %v377
        %416 = vmatprep.subr.mxu0 %v380
        %417 = vmatpush1.msra.mxu0 %v379
        %418 = vmatprep.subr.mxu0 %v382
        %419 = vmatpush1.msra.mxu0 %v381
        %420 = vmatprep.subr.mxu0 %v384
        %421 = vmatpush1.msra.mxu0 %v383
        %422 = vmatprep.subr.mxu0 %v386
        %423 = vmatpush1.msra.mxu0 %v385
        %424 = vmatprep.subr.mxu0 0.0
        %425 = vmatpush1.msra.mxu0 0.0
        %426 = vmatprep.subr.mxu0 0.0
        %427 = vmatpush1.msra.mxu0 0.0
        %428 = vmatprep.subr.mxu0 0.0
        %429 = vmatpush1.msra.mxu0 0.0
        %430 = vmatprep.subr.mxu0 0.0
        %431 = vmatpush1.msra.mxu0 0.0
        %432 = vmatprep.subr.mxu0 0.0
        %433 = vmatpush1.msra.mxu0 0.0
        %434 = vmatprep.subr.mxu0 0.0
        %435 = vmatpush1.msra.mxu0 0.0
        %436 = vmatprep.subr.mxu0 0.0
        %437 = vmatpush1.msra.mxu0 0.0
        %438 = vmatprep.subr.mxu0 0.0
        %439 = vmatpush1.msra.mxu0 0.0
        %440 = vmatprep.subr.mxu0 0.0
        %441 = vmatpush1.msra.mxu0 0.0
        %442 = vmatprep.subr.mxu0 0.0
        %443 = vmatpush1.msra.mxu0 0.0
        %444 = vmatprep.subr.mxu0 0.0
        %445 = vmatpush1.msra.mxu0 0.0
        %446 = vmatprep.subr.mxu0 0.0
        %447 = vmatpush1.msra.mxu0 0.0
        %448 = vmatprep.subr.mxu0 0.0
        %449 = vmatpush1.msra.mxu0 0.0
        %450 = vmatprep.subr.mxu0 0.0
        %451 = vmatpush1.msra.mxu0 0.0
        %452 = vmatprep.subr.mxu0 0.0
        %453 = vmatpush1.msra.mxu0 0.0
        %454 = vmatprep.subr.mxu0 0.0
        %455 = vmatpush1.msra.mxu0 0.0
        %456 = vmatprep.subr.mxu0 0.0
        %457 = vmatpush1.msra.mxu0 0.0
        %458 = vmatprep.subr.mxu0 0.0
        %459 = vmatpush1.msra.mxu0 0.0
        %460 = vmatprep.subr.mxu0 0.0
        %461 = vmatpush1.msra.mxu0 0.0
        %462 = vmatprep.subr.mxu0 0.0
        %463 = vmatpush1.msra.mxu0 0.0
        %464 = vmatprep.mubr.f32.mxu0 0.0
        %465 = vmatmul.mubr.f32.gmra.mrb[0].mxu0 %v389
        %v466 = vpop.f32.mrb[0].mxu0
        %v467 = vadd.f32 0.0, %v466
        %v468 = vpop.f32.mrb[0].mxu0
        %v469 = vadd.f32 0.0, %v468
        %470 = vmatprep.mubr.f32.mxu0 0.0
        %471 = vmatmul.mubr.f32.gmra.mrb[0].mxu0 %v392
        %v472 = vpop.f32.mrb[0].mxu0
        %v473 = vadd.f32 0.0, %v472
        %v474 = vpop.f32.mrb[0].mxu0
        %v475 = vadd.f32 0.0, %v474
        %476 = vmatprep.mubr.f32.mxu0 0.0
        %477 = vmatmul.mubr.f32.gmra.mrb[0].mxu0 %v395
        %v478 = vpop.f32.mrb[0].mxu0
        %v479 = vadd.f32 0.0, %v478
        %v480 = vpop.f32.mrb[0].mxu0
        %v481 = vadd.f32 0.0, %v480
        %482 = vmatprep.mubr.f32.mxu0 0.0
        %483 = vmatmul.mubr.f32.gmra.mrb[0].mxu0 %v398
        %v484 = vpop.f32.mrb[0].mxu0
        %v485 = vadd.f32 0.0, %v484
        %v486 = vpop.f32.mrb[0].mxu0
        %v487 = vadd.f32 0.0, %v486
        %488 = vdwg.mxu0
        %v490 = vsel %vm387, %v330, 0
        %v493 = vsel %vm387, %v331, 0
        %v496 = vsel %vm387, %v332, 0
        %v499 = vsel %vm387, %v333, 0
        %501 = vmatprep.subr.mxu0 %v335
        %502 = vmatpush1.msra.mxu0 %v334
        %503 = vmatprep.subr.mxu0 %v337
        %504 = vmatpush1.msra.mxu0 %v336
        %505 = vmatprep.subr.mxu0 %v339
        %506 = vmatpush1.msra.mxu0 %v338
        %507 = vmatprep.subr.mxu0 %v341
        %508 = vmatpush1.msra.mxu0 %v340
        %509 = vmatprep.subr.mxu0 %v343
        %510 = vmatpush1.msra.mxu0 %v342
        %511 = vmatprep.subr.mxu0 %v345
        %512 = vmatpush1.msra.mxu0 %v344
        %513 = vmatprep.subr.mxu0 %v347
        %514 = vmatpush1.msra.mxu0 %v346
        %515 = vmatprep.subr.mxu0 %v349
        %516 = vmatpush1.msra.mxu0 %v348
        %517 = vmatprep.subr.mxu0 %v351
        %518 = vmatpush1.msra.mxu0 %v350
        %519 = vmatprep.subr.mxu0 %v353
        %520 = vmatpush1.msra.mxu0 %v352
        %521 = vmatprep.subr.mxu0 %v355
        %522 = vmatpush1.msra.mxu0 %v354
        %523 = vmatprep.subr.mxu0 %v357
        %524 = vmatpush1.msra.mxu0 %v356
        %525 = vmatprep.subr.mxu0 0.0
        %526 = vmatpush1.msra.mxu0 0.0
        %527 = vmatprep.subr.mxu0 0.0
        %528 = vmatpush1.msra.mxu0 0.0
        %529 = vmatprep.subr.mxu0 0.0
        %530 = vmatpush1.msra.mxu0 0.0
        %531 = vmatprep.subr.mxu0 0.0
        %532 = vmatpush1.msra.mxu0 0.0
        %533 = vmatprep.subr.mxu0 0.0
        %534 = vmatpush1.msra.mxu0 0.0
        %535 = vmatprep.subr.mxu0 0.0
        %536 = vmatpush1.msra.mxu0 0.0
        %537 = vmatprep.subr.mxu0 0.0
        %538 = vmatpush1.msra.mxu0 0.0
        %539 = vmatprep.subr.mxu0 0.0
        %540 = vmatpush1.msra.mxu0 0.0
        %541 = vmatprep.subr.mxu0 0.0
        %542 = vmatpush1.msra.mxu0 0.0
        %543 = vmatprep.subr.mxu0 0.0
        %544 = vmatpush1.msra.mxu0 0.0
        %545 = vmatprep.subr.mxu0 0.0
        %546 = vmatpush1.msra.mxu0 0.0
        %547 = vmatprep.subr.mxu0 0.0
        %548 = vmatpush1.msra.mxu0 0.0
        %549 = vmatprep.subr.mxu0 0.0
        %550 = vmatpush1.msra.mxu0 0.0
        %551 = vmatprep.subr.mxu0 0.0
        %552 = vmatpush1.msra.mxu0 0.0
        %553 = vmatprep.subr.mxu0 0.0
        %554 = vmatpush1.msra.mxu0 0.0
        %555 = vmatprep.subr.mxu0 0.0
        %556 = vmatpush1.msra.mxu0 0.0
        %557 = vmatprep.subr.mxu0 0.0
        %558 = vmatpush1.msra.mxu0 0.0
        %559 = vmatprep.subr.mxu0 0.0
        %560 = vmatpush1.msra.mxu0 0.0
        %561 = vmatprep.subr.mxu0 0.0
        %562 = vmatpush1.msra.mxu0 0.0
        %563 = vmatprep.subr.mxu0 0.0
        %564 = vmatpush1.msra.mxu0 0.0
        %565 = vmatprep.mubr.f32.mxu0 0.0
        %566 = vmatmul.mubr.f32.gmra.mrb[0].mxu0 %v490
        %v567 = vpop.f32.mrb[0].mxu0
        %v568 = vadd.f32 %v467, %v567
        %v569 = vpop.f32.mrb[0].mxu0
        %v570 = vadd.f32 %v469, %v569
        %571 = vmatprep.mubr.f32.mxu0 0.0
        %572 = vmatmul.mubr.f32.gmra.mrb[0].mxu0 %v493
        %v573 = vpop.f32.mrb[0].mxu0
        %v574 = vadd.f32 %v473, %v573
        %v575 = vpop.f32.mrb[0].mxu0
        %v576 = vadd.f32 %v475, %v575
        %577 = vmatprep.mubr.f32.mxu0 0.0
        %578 = vmatmul.mubr.f32.gmra.mrb[0].mxu0 %v496
        %v579 = vpop.f32.mrb[0].mxu0
        %v580 = vadd.f32 %v479, %v579
        %v581 = vpop.f32.mrb[0].mxu0
        %v582 = vadd.f32 %v481, %v581
        %583 = vmatprep.mubr.f32.mxu0 0.0
        %584 = vmatmul.mubr.f32.gmra.mrb[0].mxu0 %v499
        %v585 = vpop.f32.mrb[0].mxu0
        %v586 = vadd.f32 %v485, %v585
        %v587 = vpop.f32.mrb[0].mxu0
        %v588 = vadd.f32 %v487, %v587
        %589 = vdwg.mxu0
        %v590 = vld [vmem:[%s329 + $0x2] sm:$0xff]
        %v591 = vld [vmem:[%s329 + $0xa] sm:$0xff]
        %v592 = vld [vmem:[%s329 + $0x12] sm:$0xff]
        %v593 = vld [vmem:[%s329 + $0x1a] sm:$0xf]
        %s594 = scalar_lea.vmem %s1, 384
        %v595 = vld [vmem:[%s594] sm:$0xff]
        %v596 = vld [vmem:[%s594 + $0x8] sm:$0xff]
        %v597 = vld [vmem:[%s594 + $0x10] sm:$0xff]
        %v598 = vld [vmem:[%s594 + $0x18] sm:$0xff]
        %v599 = vld [vmem:[%s594 + $0x20] sm:$0xff]
        %v600 = vld [vmem:[%s594 + $0x28] sm:$0xff]
        %v601 = vld [vmem:[%s594 + $0x30] sm:$0xff]
        %v602 = vld [vmem:[%s594 + $0x38] sm:$0xff]
        %v603 = vld [vmem:[%s594 + $0x40] sm:$0xff]
        %v604 = vld [vmem:[%s594 + $0x48] sm:$0xff]
        %v605 = vld [vmem:[%s594 + $0x50] sm:$0xff]
        %v606 = vld [vmem:[%s594 + $0x58] sm:$0xff]
        %v607 = vld [vmem:[%s594 + $0x60] sm:$0xff]
        %v608 = vld [vmem:[%s594 + $0x68] sm:$0xff]
        %v609 = vld [vmem:[%s594 + $0x70] sm:$0xff]
        %v610 = vld [vmem:[%s594 + $0x78] sm:$0xff]
        %v611 = vld [vmem:[%s594 + $0x80] sm:$0xff]
        %v612 = vld [vmem:[%s594 + $0x88] sm:$0xff]
        %v613 = vld [vmem:[%s594 + $0x90] sm:$0xff]
        %v614 = vld [vmem:[%s594 + $0x98] sm:$0xff]
        %v615 = vld [vmem:[%s594 + $0xa0] sm:$0xff]
        %v616 = vld [vmem:[%s594 + $0xa8] sm:$0xff]
        %v617 = vld [vmem:[%s594 + $0xb0] sm:$0xff]
        %v618 = vld [vmem:[%s594 + $0xb8] sm:$0xff]
        %v620 = vsel %vm387, %v590, 0
        %v623 = vsel %vm387, %v591, 0
        %v626 = vsel %vm387, %v592, 0
        %v629 = vsel %vm387, %v593, 0
        %631 = vmatprep.subr.mxu0 %v596
        %632 = vmatpush1.msra.mxu0 %v595
        %633 = vmatprep.subr.mxu0 %v598
        %634 = vmatpush1.msra.mxu0 %v597
        %635 = vmatprep.subr.mxu0 %v600
        %636 = vmatpush1.msra.mxu0 %v599
        %637 = vmatprep.subr.mxu0 %v602
        %638 = vmatpush1.msra.mxu0 %v601
        %639 = vmatprep.subr.mxu0 %v604
        %640 = vmatpush1.msra.mxu0 %v603
        %641 = vmatprep.subr.mxu0 %v606
        %642 = vmatpush1.msra.mxu0 %v605
        %643 = vmatprep.subr.mxu0 %v608
        %644 = vmatpush1.msra.mxu0 %v607
        %645 = vmatprep.subr.mxu0 %v610
        %646 = vmatpush1.msra.mxu0 %v609
        %647 = vmatprep.subr.mxu0 %v612
        %648 = vmatpush1.msra.mxu0 %v611
        %649 = vmatprep.subr.mxu0 %v614
        %650 = vmatpush1.msra.mxu0 %v613
        %651 = vmatprep.subr.mxu0 %v616
        %652 = vmatpush1.msra.mxu0 %v615
        %653 = vmatprep.subr.mxu0 %v618
        %654 = vmatpush1.msra.mxu0 %v617
        %655 = vmatprep.subr.mxu0 0.0
        %656 = vmatpush1.msra.mxu0 0.0
        %657 = vmatprep.subr.mxu0 0.0
        %658 = vmatpush1.msra.mxu0 0.0
        %659 = vmatprep.subr.mxu0 0.0
        %660 = vmatpush1.msra.mxu0 0.0
        %661 = vmatprep.subr.mxu0 0.0
        %662 = vmatpush1.msra.mxu0 0.0
        %663 = vmatprep.subr.mxu0 0.0
        %664 = vmatpush1.msra.mxu0 0.0
        %665 = vmatprep.subr.mxu0 0.0
        %666 = vmatpush1.msra.mxu0 0.0
        %667 = vmatprep.subr.mxu0 0.0
        %668 = vmatpush1.msra.mxu0 0.0
        %669 = vmatprep.subr.mxu0 0.0
        %670 = vmatpush1.msra.mxu0 0.0
        %671 = vmatprep.subr.mxu0 0.0
        %672 = vmatpush1.msra.mxu0 0.0
        %673 = vmatprep.subr.mxu0 0.0
        %674 = vmatpush1.msra.mxu0 0.0
        %675 = vmatprep.subr.mxu0 0.0
        %676 = vmatpush1.msra.mxu0 0.0
        %677 = vmatprep.subr.mxu0 0.0
        %678 = vmatpush1.msra.mxu0 0.0
        %679 = vmatprep.subr.mxu0 0.0
        %680 = vmatpush1.msra.mxu0 0.0
        %681 = vmatprep.subr.mxu0 0.0
        %682 = vmatpush1.msra.mxu0 0.0
        %683 = vmatprep.subr.mxu0 0.0
        %684 = vmatpush1.msra.mxu0 0.0
        %685 = vmatprep.subr.mxu0 0.0
        %686 = vmatpush1.msra.mxu0 0.0
        %687 = vmatprep.subr.mxu0 0.0
        %688 = vmatpush1.msra.mxu0 0.0
        %689 = vmatprep.subr.mxu0 0.0
        %690 = vmatpush1.msra.mxu0 0.0
        %691 = vmatprep.subr.mxu0 0.0
        %692 = vmatpush1.msra.mxu0 0.0
        %693 = vmatprep.subr.mxu0 0.0
        %694 = vmatpush1.msra.mxu0 0.0
        %695 = vmatprep.mubr.f32.mxu0 0.0
        %696 = vmatmul.mubr.f32.gmra.mrb[0].mxu0 %v620
        %v697 = vpop.f32.mrb[0].mxu0
        %v698 = vadd.f32 0.0, %v697
        %v699 = vpop.f32.mrb[0].mxu0
        %v700 = vadd.f32 0.0, %v699
        %701 = vmatprep.mubr.f32.mxu0 0.0
        %702 = vmatmul.mubr.f32.gmra.mrb[0].mxu0 %v623
        %v703 = vpop.f32.mrb[0].mxu0
        %v704 = vadd.f32 0.0, %v703
        %v705 = vpop.f32.mrb[0].mxu0
        %v706 = vadd.f32 0.0, %v705
        %707 = vmatprep.mubr.f32.mxu0 0.0
        %708 = vmatmul.mubr.f32.gmra.mrb[0].mxu0 %v626
        %v709 = vpop.f32.mrb[0].mxu0
        %v710 = vadd.f32 0.0, %v709
        %v711 = vpop.f32.mrb[0].mxu0
        %v712 = vadd.f32 0.0, %v711
        %713 = vmatprep.mubr.f32.mxu0 0.0
        %714 = vmatmul.mubr.f32.gmra.mrb[0].mxu0 %v629
        %v715 = vpop.f32.mrb[0].mxu0
        %v716 = vadd.f32 0.0, %v715
        %v717 = vpop.f32.mrb[0].mxu0
        %v718 = vadd.f32 0.0, %v717
        %719 = vdwg.mxu0
        %v720 = vadd.f32 %v568, %v698
        %v721 = vadd.f32 %v570, %v700
        %v722 = vadd.f32 %v574, %v704
        %v723 = vadd.f32 %v576, %v706
        %v724 = vadd.f32 %v580, %v710
        %v725 = vadd.f32 %v582, %v712
        %v726 = vadd.f32 %v586, %v716
        %v727 = vadd.f32 %v588, %v718
        %v728 = vld [vmem:[%s329 + $0x3] sm:$0xff]
        %v729 = vld [vmem:[%s329 + $0xb] sm:$0xff]
        %v730 = vld [vmem:[%s329 + $0x13] sm:$0xff]
        %v731 = vld [vmem:[%s329 + $0x1b] sm:$0xf]
        %s732 = scalar_lea.vmem %s1, 576
        %v733 = vld [vmem:[%s732] sm:$0xff]
        %v734 = vld [vmem:[%s732 + $0x8] sm:$0xff]
        %v735 = vld [vmem:[%s732 + $0x10] sm:$0xff]
        %v736 = vld [vmem:[%s732 + $0x18] sm:$0xff]
        %v737 = vld [vmem:[%s732 + $0x20] sm:$0xff]
        %v738 = vld [vmem:[%s732 + $0x28] sm:$0xff]
        %v739 = vld [vmem:[%s732 + $0x30] sm:$0xff]
        %v740 = vld [vmem:[%s732 + $0x38] sm:$0xff]
        %v741 = vld [vmem:[%s732 + $0x40] sm:$0xff]
        %v742 = vld [vmem:[%s732 + $0x48] sm:$0xff]
        %v743 = vld [vmem:[%s732 + $0x50] sm:$0xff]
        %v744 = vld [vmem:[%s732 + $0x58] sm:$0xff]
        %v745 = vld [vmem:[%s732 + $0x60] sm:$0xff]
        %v746 = vld [vmem:[%s732 + $0x68] sm:$0xff]
        %v747 = vld [vmem:[%s732 + $0x70] sm:$0xff]
        %v748 = vld [vmem:[%s732 + $0x78] sm:$0xff]
        %v749 = vld [vmem:[%s732 + $0x80] sm:$0xff]
        %v750 = vld [vmem:[%s732 + $0x88] sm:$0xff]
        %v751 = vld [vmem:[%s732 + $0x90] sm:$0xff]
        %v752 = vld [vmem:[%s732 + $0x98] sm:$0xff]
        %v753 = vld [vmem:[%s732 + $0xa0] sm:$0xff]
        %v754 = vld [vmem:[%s732 + $0xa8] sm:$0xff]
        %v755 = vld [vmem:[%s732 + $0xb0] sm:$0xff]
        %v756 = vld [vmem:[%s732 + $0xb8] sm:$0xff]
        %v758 = vsel %vm387, %v728, 0
        %v761 = vsel %vm387, %v729, 0
        %v764 = vsel %vm387, %v730, 0
        %v767 = vsel %vm387, %v731, 0
        %769 = vmatprep.subr.mxu0 %v734
        %770 = vmatpush1.msra.mxu0 %v733
        %771 = vmatprep.subr.mxu0 %v736
        %772 = vmatpush1.msra.mxu0 %v735
        %773 = vmatprep.subr.mxu0 %v738
        %774 = vmatpush1.msra.mxu0 %v737
        %775 = vmatprep.subr.mxu0 %v740
        %776 = vmatpush1.msra.mxu0 %v739
        %777 = vmatprep.subr.mxu0 %v742
        %778 = vmatpush1.msra.mxu0 %v741
        %779 = vmatprep.subr.mxu0 %v744
        %780 = vmatpush1.msra.mxu0 %v743
        %781 = vmatprep.subr.mxu0 %v746
        %782 = vmatpush1.msra.mxu0 %v745
        %783 = vmatprep.subr.mxu0 %v748
        %784 = vmatpush1.msra.mxu0 %v747
        %785 = vmatprep.subr.mxu0 %v750
        %786 = vmatpush1.msra.mxu0 %v749
        %787 = vmatprep.subr.mxu0 %v752
        %788 = vmatpush1.msra.mxu0 %v751
        %789 = vmatprep.subr.mxu0 %v754
        %790 = vmatpush1.msra.mxu0 %v753
        %791 = vmatprep.subr.mxu0 %v756
        %792 = vmatpush1.msra.mxu0 %v755
        %793 = vmatprep.subr.mxu0 0.0
        %794 = vmatpush1.msra.mxu0 0.0
        %795 = vmatprep.subr.mxu0 0.0
        %796 = vmatpush1.msra.mxu0 0.0
        %797 = vmatprep.subr.mxu0 0.0
        %798 = vmatpush1.msra.mxu0 0.0
        %799 = vmatprep.subr.mxu0 0.0
        %800 = vmatpush1.msra.mxu0 0.0
        %801 = vmatprep.subr.mxu0 0.0
        %802 = vmatpush1.msra.mxu0 0.0
        %803 = vmatprep.subr.mxu0 0.0
        %804 = vmatpush1.msra.mxu0 0.0
        %805 = vmatprep.subr.mxu0 0.0
        %806 = vmatpush1.msra.mxu0 0.0
        %807 = vmatprep.subr.mxu0 0.0
        %808 = vmatpush1.msra.mxu0 0.0
        %809 = vmatprep.subr.mxu0 0.0
        %810 = vmatpush1.msra.mxu0 0.0
        %811 = vmatprep.subr.mxu0 0.0
        %812 = vmatpush1.msra.mxu0 0.0
        %813 = vmatprep.subr.mxu0 0.0
        %814 = vmatpush1.msra.mxu0 0.0
        %815 = vmatprep.subr.mxu0 0.0
        %816 = vmatpush1.msra.mxu0 0.0
        %817 = vmatprep.subr.mxu0 0.0
        %818 = vmatpush1.msra.mxu0 0.0
        %819 = vmatprep.subr.mxu0 0.0
        %820 = vmatpush1.msra.mxu0 0.0
        %821 = vmatprep.subr.mxu0 0.0
        %822 = vmatpush1.msra.mxu0 0.0
        %823 = vmatprep.subr.mxu0 0.0
        %824 = vmatpush1.msra.mxu0 0.0
        %825 = vmatprep.subr.mxu0 0.0
        %826 = vmatpush1.msra.mxu0 0.0
        %827 = vmatprep.subr.mxu0 0.0
        %828 = vmatpush1.msra.mxu0 0.0
        %829 = vmatprep.subr.mxu0 0.0
        %830 = vmatpush1.msra.mxu0 0.0
        %831 = vmatprep.subr.mxu0 0.0
        %832 = vmatpush1.msra.mxu0 0.0
        %833 = vmatprep.mubr.f32.mxu0 0.0
        %834 = vmatmul.mubr.f32.gmra.mrb[0].mxu0 %v758
        %v835 = vpop.f32.mrb[0].mxu0
        %v836 = vadd.f32 0.0, %v835
        %v837 = vpop.f32.mrb[0].mxu0
        %v838 = vadd.f32 0.0, %v837
        %839 = vmatprep.mubr.f32.mxu0 0.0
        %840 = vmatmul.mubr.f32.gmra.mrb[0].mxu0 %v761
        %v841 = vpop.f32.mrb[0].mxu0
        %v842 = vadd.f32 0.0, %v841
        %v843 = vpop.f32.mrb[0].mxu0
        %v844 = vadd.f32 0.0, %v843
        %845 = vmatprep.mubr.f32.mxu0 0.0
        %846 = vmatmul.mubr.f32.gmra.mrb[0].mxu0 %v764
        %v847 = vpop.f32.mrb[0].mxu0
        %v848 = vadd.f32 0.0, %v847
        %v849 = vpop.f32.mrb[0].mxu0
        %v850 = vadd.f32 0.0, %v849
        %851 = vmatprep.mubr.f32.mxu0 0.0
        %852 = vmatmul.mubr.f32.gmra.mrb[0].mxu0 %v767
        %v853 = vpop.f32.mrb[0].mxu0
        %v854 = vadd.f32 0.0, %v853
        %v855 = vpop.f32.mrb[0].mxu0
        %v856 = vadd.f32 0.0, %v855
        %857 = vdwg.mxu0
        %v858 = vadd.f32 %v720, %v836
        %v859 = vadd.f32 %v721, %v838
        %v860 = vadd.f32 %v722, %v842
        %v861 = vadd.f32 %v723, %v844
        %v862 = vadd.f32 %v724, %v848
        %v863 = vadd.f32 %v725, %v850
        %v864 = vadd.f32 %v726, %v854
        %v865 = vadd.f32 %v727, %v856
        %v866 = vld [vmem:[%s329 + $0x4] sm:$0xff]
        %v867 = vld [vmem:[%s329 + $0xc] sm:$0xff]
        %v868 = vld [vmem:[%s329 + $0x14] sm:$0xff]
        %v869 = vld [vmem:[%s329 + $0x1c] sm:$0xf]
        %s870 = scalar_lea.vmem %s1, 768
        %v871 = vld [vmem:[%s870] sm:$0xff]
        %v872 = vld [vmem:[%s870 + $0x8] sm:$0xff]
        %v873 = vld [vmem:[%s870 + $0x10] sm:$0xff]
        %v874 = vld [vmem:[%s870 + $0x18] sm:$0xff]
        %v875 = vld [vmem:[%s870 + $0x20] sm:$0xff]
        %v876 = vld [vmem:[%s870 + $0x28] sm:$0xff]
        %v877 = vld [vmem:[%s870 + $0x30] sm:$0xff]
        %v878 = vld [vmem:[%s870 + $0x38] sm:$0xff]
        %v879 = vld [vmem:[%s870 + $0x40] sm:$0xff]
        %v880 = vld [vmem:[%s870 + $0x48] sm:$0xff]
        %v881 = vld [vmem:[%s870 + $0x50] sm:$0xff]
        %v882 = vld [vmem:[%s870 + $0x58] sm:$0xff]
        %v883 = vld [vmem:[%s870 + $0x60] sm:$0xff]
        %v884 = vld [vmem:[%s870 + $0x68] sm:$0xff]
        %v885 = vld [vmem:[%s870 + $0x70] sm:$0xff]
        %v886 = vld [vmem:[%s870 + $0x78] sm:$0xff]
        %v887 = vld [vmem:[%s870 + $0x80] sm:$0xff]
        %v888 = vld [vmem:[%s870 + $0x88] sm:$0xff]
        %v889 = vld [vmem:[%s870 + $0x90] sm:$0xff]
        %v890 = vld [vmem:[%s870 + $0x98] sm:$0xff]
        %v891 = vld [vmem:[%s870 + $0xa0] sm:$0xff]
        %v892 = vld [vmem:[%s870 + $0xa8] sm:$0xff]
        %v893 = vld [vmem:[%s870 + $0xb0] sm:$0xff]
        %v894 = vld [vmem:[%s870 + $0xb8] sm:$0xff]
        %v896 = vsel %vm387, %v866, 0
        %v899 = vsel %vm387, %v867, 0
        %v902 = vsel %vm387, %v868, 0
        %v905 = vsel %vm387, %v869, 0
        %907 = vmatprep.subr.mxu0 %v872
        %908 = vmatpush1.msra.mxu0 %v871
        %909 = vmatprep.subr.mxu0 %v874
        %910 = vmatpush1.msra.mxu0 %v873
        %911 = vmatprep.subr.mxu0 %v876
        %912 = vmatpush1.msra.mxu0 %v875
        %913 = vmatprep.subr.mxu0 %v878
        %914 = vmatpush1.msra.mxu0 %v877
        %915 = vmatprep.subr.mxu0 %v880
        %916 = vmatpush1.msra.mxu0 %v879
        %917 = vmatprep.subr.mxu0 %v882
        %918 = vmatpush1.msra.mxu0 %v881
        %919 = vmatprep.subr.mxu0 %v884
        %920 = vmatpush1.msra.mxu0 %v883
        %921 = vmatprep.subr.mxu0 %v886
        %922 = vmatpush1.msra.mxu0 %v885
        %923 = vmatprep.subr.mxu0 %v888
        %924 = vmatpush1.msra.mxu0 %v887
        %925 = vmatprep.subr.mxu0 %v890
        %926 = vmatpush1.msra.mxu0 %v889
        %927 = vmatprep.subr.mxu0 %v892
        %928 = vmatpush1.msra.mxu0 %v891
        %929 = vmatprep.subr.mxu0 %v894
        %930 = vmatpush1.msra.mxu0 %v893
        %931 = vmatprep.subr.mxu0 0.0
        %932 = vmatpush1.msra.mxu0 0.0
        %933 = vmatprep.subr.mxu0 0.0
        %934 = vmatpush1.msra.mxu0 0.0
        %935 = vmatprep.subr.mxu0 0.0
        %936 = vmatpush1.msra.mxu0 0.0
        %937 = vmatprep.subr.mxu0 0.0
        %938 = vmatpush1.msra.mxu0 0.0
        %939 = vmatprep.subr.mxu0 0.0
        %940 = vmatpush1.msra.mxu0 0.0
        %941 = vmatprep.subr.mxu0 0.0
        %942 = vmatpush1.msra.mxu0 0.0
        %943 = vmatprep.subr.mxu0 0.0
        %944 = vmatpush1.msra.mxu0 0.0
        %945 = vmatprep.subr.mxu0 0.0
        %946 = vmatpush1.msra.mxu0 0.0
        %947 = vmatprep.subr.mxu0 0.0
        %948 = vmatpush1.msra.mxu0 0.0
        %949 = vmatprep.subr.mxu0 0.0
        %950 = vmatpush1.msra.mxu0 0.0
        %951 = vmatprep.subr.mxu0 0.0
        %952 = vmatpush1.msra.mxu0 0.0
        %953 = vmatprep.subr.mxu0 0.0
        %954 = vmatpush1.msra.mxu0 0.0
        %955 = vmatprep.subr.mxu0 0.0
        %956 = vmatpush1.msra.mxu0 0.0
        %957 = vmatprep.subr.mxu0 0.0
        %958 = vmatpush1.msra.mxu0 0.0
        %959 = vmatprep.subr.mxu0 0.0
        %960 = vmatpush1.msra.mxu0 0.0
        %961 = vmatprep.subr.mxu0 0.0
        %962 = vmatpush1.msra.mxu0 0.0
        %963 = vmatprep.subr.mxu0 0.0
        %964 = vmatpush1.msra.mxu0 0.0
        %965 = vmatprep.subr.mxu0 0.0
        %966 = vmatpush1.msra.mxu0 0.0
        %967 = vmatprep.subr.mxu0 0.0
        %968 = vmatpush1.msra.mxu0 0.0
        %969 = vmatprep.subr.mxu0 0.0
        %970 = vmatpush1.msra.mxu0 0.0
        %971 = vmatprep.mubr.f32.mxu0 0.0
        %972 = vmatmul.mubr.f32.gmra.mrb[0].mxu0 %v896
        %v973 = vpop.f32.mrb[0].mxu0
        %v974 = vadd.f32 0.0, %v973
        %v975 = vpop.f32.mrb[0].mxu0
        %v976 = vadd.f32 0.0, %v975
        %977 = vmatprep.mubr.f32.mxu0 0.0
        %978 = vmatmul.mubr.f32.gmra.mrb[0].mxu0 %v899
        %v979 = vpop.f32.mrb[0].mxu0
        %v980 = vadd.f32 0.0, %v979
        %v981 = vpop.f32.mrb[0].mxu0
        %v982 = vadd.f32 0.0, %v981
        %983 = vmatprep.mubr.f32.mxu0 0.0
        %984 = vmatmul.mubr.f32.gmra.mrb[0].mxu0 %v902
        %v985 = vpop.f32.mrb[0].mxu0
        %v986 = vadd.f32 0.0, %v985
        %v987 = vpop.f32.mrb[0].mxu0
        %v988 = vadd.f32 0.0, %v987
        %989 = vmatprep.mubr.f32.mxu0 0.0
        %990 = vmatmul.mubr.f32.gmra.mrb[0].mxu0 %v905
        %v991 = vpop.f32.mrb[0].mxu0
        %v992 = vadd.f32 0.0, %v991
        %v993 = vpop.f32.mrb[0].mxu0
        %v994 = vadd.f32 0.0, %v993
        %995 = vdwg.mxu0
        %v996 = vadd.f32 %v858, %v974
        %v997 = vadd.f32 %v859, %v976
        %v998 = vadd.f32 %v860, %v980
        %v999 = vadd.f32 %v861, %v982
        %v1000 = vadd.f32 %v862, %v986
        %v1001 = vadd.f32 %v863, %v988
        %v1002 = vadd.f32 %v864, %v992
        %v1003 = vadd.f32 %v865, %v994
        %v1004 = vmax.f32 %v996, 0.0
        %v1005 = vmax.f32 %v997, 0.0
        %v1006 = vmax.f32 %v998, 0.0
        %v1007 = vmax.f32 %v999, 0.0
        %v1008 = vmax.f32 %v1000, 0.0
        %v1009 = vmax.f32 %v1001, 0.0
        %v1010 = vmax.f32 %v1002, 0.0
        %v1011 = vmax.f32 %v1003, 0.0
        %v1012 = vld [vmem:[%s3] sm:$0xff]
        %v1013 = vld [vmem:[%s3 + $0x8] sm:$0x3f]
        %v1014 = vld [vmem:[%s2] sm:$0xff]
        %v1015 = vld [vmem:[%s2 + $0x8] sm:$0xff]
        %v1016 = vld [vmem:[%s2 + $0x10] sm:$0xff]
        %v1017 = vld [vmem:[%s2 + $0x18] sm:$0xff]
        %v1018 = vld [vmem:[%s2 + $0x20] sm:$0xff]
        %v1019 = vld [vmem:[%s2 + $0x28] sm:$0xff]
        %v1020 = vld [vmem:[%s2 + $0x30] sm:$0xff]
        %v1021 = vld [vmem:[%s2 + $0x38] sm:$0xff]
        %v1022 = vld [vmem:[%s2 + $0x40] sm:$0xff]
        %v1023 = vld [vmem:[%s2 + $0x48] sm:$0xff]
        %v1024 = vld [vmem:[%s2 + $0x50] sm:$0xff]
        %v1025 = vld [vmem:[%s2 + $0x58] sm:$0xff]
        %v1026 = vld [vmem:[%s2 + $0x60] sm:$0xff]
        %v1027 = vld [vmem:[%s2 + $0x68] sm:$0xff]
        %v1028 = vld [vmem:[%s2 + $0x70] sm:$0xff]
        %v1029 = vld [vmem:[%s2 + $0x78] sm:$0xff]
        %v1030 = vld [vmem:[%s2 + $0x80] sm:$0xff]
        %v1031 = vld [vmem:[%s2 + $0x88] sm:$0xff]
        %v1032 = vld [vmem:[%s2 + $0x90] sm:$0xff]
        %v1033 = vld [vmem:[%s2 + $0x98] sm:$0xff]
        %v1034 = vld [vmem:[%s2 + $0xa0] sm:$0xff]
        %v1035 = vld [vmem:[%s2 + $0xa8] sm:$0xff]
        %v1036 = vld [vmem:[%s2 + $0xb0] sm:$0xff]
        %v1037 = vld [vmem:[%s2 + $0xb8] sm:$0xff]
        %v1038 = vld [vmem:[%s2 + $0xc0] sm:$0xff]
        %v1039 = vld [vmem:[%s2 + $0xc8] sm:$0xff]
        %v1040 = vld [vmem:[%s2 + $0xd0] sm:$0xff]
        %v1041 = vld [vmem:[%s2 + $0xd8] sm:$0xff]
        %v1043 = vsel %vm387, %v1005, 0
        %v1046 = vsel %vm387, %v1007, 0
        %v1049 = vsel %vm387, %v1009, 0
        %v1052 = vsel %vm387, %v1011, 0
        %1054 = vmatprep.subr.mxu0 0.0
        %1055 = vmatpush1.msra.mxu0 %v1014
        %1056 = vmatprep.subr.mxu0 0.0
        %1057 = vmatpush1.msra.mxu0 %v1015
        %1058 = vmatprep.subr.mxu0 0.0
        %1059 = vmatpush1.msra.mxu0 %v1016
        %1060 = vmatprep.subr.mxu0 0.0
        %1061 = vmatpush1.msra.mxu0 %v1017
        %1062 = vmatprep.subr.mxu0 0.0
        %1063 = vmatpush1.msra.mxu0 %v1018
        %1064 = vmatprep.subr.mxu0 0.0
        %1065 = vmatpush1.msra.mxu0 %v1019
        %1066 = vmatprep.subr.mxu0 0.0
        %1067 = vmatpush1.msra.mxu0 %v1020
        %1068 = vmatprep.subr.mxu0 0.0
        %1069 = vmatpush1.msra.mxu0 %v1021
        %1070 = vmatprep.subr.mxu0 0.0
        %1071 = vmatpush1.msra.mxu0 %v1022
        %1072 = vmatprep.subr.mxu0 0.0
        %1073 = vmatpush1.msra.mxu0 %v1023
        %1074 = vmatprep.subr.mxu0 0.0
        %1075 = vmatpush1.msra.mxu0 %v1024
        %1076 = vmatprep.subr.mxu0 0.0
        %1077 = vmatpush1.msra.mxu0 %v1025
        %1078 = vmatprep.subr.mxu0 0.0
        %1079 = vmatpush1.msra.mxu0 %v1026
        %1080 = vmatprep.subr.mxu0 0.0
        %1081 = vmatpush1.msra.mxu0 %v1027
        %1082 = vmatprep.subr.mxu0 0.0
        %1083 = vmatpush1.msra.mxu0 %v1028
        %1084 = vmatprep.subr.mxu0 0.0
        %1085 = vmatpush1.msra.mxu0 %v1029
        %1086 = vmatprep.subr.mxu0 0.0
        %1087 = vmatpush1.msra.mxu0 %v1030
        %1088 = vmatprep.subr.mxu0 0.0
        %1089 = vmatpush1.msra.mxu0 %v1031
        %1090 = vmatprep.subr.mxu0 0.0
        %1091 = vmatpush1.msra.mxu0 %v1032
        %1092 = vmatprep.subr.mxu0 0.0
        %1093 = vmatpush1.msra.mxu0 %v1033
        %1094 = vmatprep.subr.mxu0 0.0
        %1095 = vmatpush1.msra.mxu0 %v1034
        %1096 = vmatprep.subr.mxu0 0.0
        %1097 = vmatpush1.msra.mxu0 %v1035
        %1098 = vmatprep.subr.mxu0 0.0
        %1099 = vmatpush1.msra.mxu0 %v1036
        %1100 = vmatprep.subr.mxu0 0.0
        %1101 = vmatpush1.msra.mxu0 %v1037
        %1102 = vmatprep.subr.mxu0 0.0
        %1103 = vmatpush1.msra.mxu0 %v1038
        %1104 = vmatprep.subr.mxu0 0.0
        %1105 = vmatpush1.msra.mxu0 %v1039
        %1106 = vmatprep.subr.mxu0 0.0
        %1107 = vmatpush1.msra.mxu0 %v1040
        %1108 = vmatprep.subr.mxu0 0.0
        %1109 = vmatpush1.msra.mxu0 %v1041
        %1110 = vmatprep.subr.mxu0 0.0
        %1111 = vmatpush1.msra.mxu0 0.0
        %1112 = vmatprep.subr.mxu0 0.0
        %1113 = vmatpush1.msra.mxu0 0.0
        %1114 = vmatprep.subr.mxu0 0.0
        %1115 = vmatpush1.msra.mxu0 0.0
        %1116 = vmatprep.subr.mxu0 0.0
        %1117 = vmatpush1.msra.mxu0 0.0
        %1118 = vmatprep.mubr.f32.mxu0 %v1043
        %1119 = vmatmul.mubr.f32.gmra.mrb[0].mxu0 %v1004
        %v1120 = vpop.f32.mrb[0].mxu0
        %v1121 = vadd.f32 0.0, %v1120
        %v1122 = vpop.f32.mrb[0].mxu0
        %1123 = vmatprep.mubr.f32.mxu0 %v1046
        %1124 = vmatmul.mubr.f32.gmra.mrb[0].mxu0 %v1006
        %v1125 = vpop.f32.mrb[0].mxu0
        %v1126 = vadd.f32 0.0, %v1125
        %v1127 = vpop.f32.mrb[0].mxu0
        %1128 = vmatprep.mubr.f32.mxu0 %v1049
        %1129 = vmatmul.mubr.f32.gmra.mrb[0].mxu0 %v1008
        %v1130 = vpop.f32.mrb[0].mxu0
        %v1131 = vadd.f32 0.0, %v1130
        %v1132 = vpop.f32.mrb[0].mxu0
        %1133 = vmatprep.mubr.f32.mxu0 %v1052
        %1134 = vmatmul.mubr.f32.gmra.mrb[0].mxu0 %v1010
        %v1135 = vpop.f32.mrb[0].mxu0
        %v1136 = vadd.f32 0.0, %v1135
        %v1137 = vpop.f32.mrb[0].mxu0
        %1138 = vdwg.mxu0
        %vm1139 = vcmask 228352
        %v1141 = vsel %vm1139, %v1012, 0
        %v1144 = vsel %vm1139, %v1013, 0
        %vm1146 = vcmask 1043456
        %v1148 = vsel %vm1146, %v1136, 0
        %1150 = vmatprep.subr.mxu0 0.0
        %1151 = vmatpush1.msra.mxu0 %v1121
        %1152 = vmatprep.subr.mxu0 0.0
        %1153 = vmatpush1.msra.mxu0 %v1126
        %1154 = vmatprep.subr.mxu0 0.0
        %1155 = vmatpush1.msra.mxu0 %v1131
        %1156 = vmatprep.subr.mxu0 0.0
        %1157 = vmatpush1.msra.mxu0 %v1148
        %1158 = vmatprep.subr.mxu0 0.0
        %1159 = vmatpush1.msra.mxu0 0.0
        %1160 = vmatprep.subr.mxu0 0.0
        %1161 = vmatpush1.msra.mxu0 0.0
        %1162 = vmatprep.subr.mxu0 0.0
        %1163 = vmatpush1.msra.mxu0 0.0
        %1164 = vmatprep.subr.mxu0 0.0
        %1165 = vmatpush1.msra.mxu0 0.0
        %1166 = vmatprep.subr.mxu0 0.0
        %1167 = vmatpush1.msra.mxu0 0.0
        %1168 = vmatprep.subr.mxu0 0.0
        %1169 = vmatpush1.msra.mxu0 0.0
        %1170 = vmatprep.subr.mxu0 0.0
        %1171 = vmatpush1.msra.mxu0 0.0
        %1172 = vmatprep.subr.mxu0 0.0
        %1173 = vmatpush1.msra.mxu0 0.0
        %1174 = vmatprep.subr.mxu0 0.0
        %1175 = vmatpush1.msra.mxu0 0.0
        %1176 = vmatprep.subr.mxu0 0.0
        %1177 = vmatpush1.msra.mxu0 0.0
        %1178 = vmatprep.subr.mxu0 0.0
        %1179 = vmatpush1.msra.mxu0 0.0
        %1180 = vmatprep.subr.mxu0 0.0
        %1181 = vmatpush1.msra.mxu0 0.0
        %1182 = vmatprep.subr.mxu0 0.0
        %1183 = vmatpush1.msra.mxu0 0.0
        %1184 = vmatprep.subr.mxu0 0.0
        %1185 = vmatpush1.msra.mxu0 0.0
        %1186 = vmatprep.subr.mxu0 0.0
        %1187 = vmatpush1.msra.mxu0 0.0
        %1188 = vmatprep.subr.mxu0 0.0
        %1189 = vmatpush1.msra.mxu0 0.0
        %1190 = vmatprep.subr.mxu0 0.0
        %1191 = vmatpush1.msra.mxu0 0.0
        %1192 = vmatprep.subr.mxu0 0.0
        %1193 = vmatpush1.msra.mxu0 0.0
        %1194 = vmatprep.subr.mxu0 0.0
        %1195 = vmatpush1.msra.mxu0 0.0
        %1196 = vmatprep.subr.mxu0 0.0
        %1197 = vmatpush1.msra.mxu0 0.0
        %1198 = vmatprep.subr.mxu0 0.0
        %1199 = vmatpush1.msra.mxu0 0.0
        %1200 = vmatprep.subr.mxu0 0.0
        %1201 = vmatpush1.msra.mxu0 0.0
        %1202 = vmatprep.subr.mxu0 0.0
        %1203 = vmatpush1.msra.mxu0 0.0
        %1204 = vmatprep.subr.mxu0 0.0
        %1205 = vmatpush1.msra.mxu0 0.0
        %1206 = vmatprep.subr.mxu0 0.0
        %1207 = vmatpush1.msra.mxu0 0.0
        %1208 = vmatprep.subr.mxu0 0.0
        %1209 = vmatpush1.msra.mxu0 0.0
        %1210 = vmatprep.subr.mxu0 0.0
        %1211 = vmatpush1.msra.mxu0 0.0
        %1212 = vmatprep.subr.mxu0 0.0
        %1213 = vmatpush1.msra.mxu0 0.0
        %1214 = vmatprep.mubr.f32.mxu0 0.0
        %1215 = vmatmul.mubr.f32.gmra.mrb[0].mxu0 %v1141
        %v1216 = vpop.f32.mrb[0].mxu0
        %v1217 = vadd.f32 0.0, %v1216
        %v1218 = vpop.f32.mrb[0].mxu0
        %1219 = vmatprep.mubr.f32.mxu0 0.0
        %1220 = vmatmul.mubr.f32.gmra.mrb[0].mxu0 %v1144
        %v1221 = vpop.f32.mrb[0].mxu0
        %v1222 = vadd.f32 0.0, %v1221
        %v1223 = vpop.f32.mrb[0].mxu0
        %1224 = vdwg.mxu0
        %vm1225 = vcmask 916480
        %1226 = vst.msk [vmem:[#allocation2] sm:$0xff] %vm1225, %v1217
        %vm1227 = vcmask 914432
        %1228 = vst.msk [vmem:[#allocation2 + $0x8] sm:$0x3f] %vm1227, %v1222
        %v1229 = vld [vmem:[#allocation2] sm:$0xff]
        %v1230 = vld [vmem:[#allocation2 + $0x8] sm:$0xf]
        %v1231 = vld [vmem:[%s4] sm:$0xff]
        %v1232 = vld [vmem:[%s4 + $0x8] sm:$0xff]
        %v1233 = vld [vmem:[%s4 + $0x10] sm:$0xff]
        %v1234 = vld [vmem:[%s4 + $0x18] sm:$0xff]
        %v1235 = vld [vmem:[%s4 + $0x20] sm:$0xff]
        %v1236 = vld [vmem:[%s4 + $0x28] sm:$0xff]
        %v1237 = vld [vmem:[%s4 + $0x30] sm:$0xff]
        %v1238 = vld [vmem:[%s4 + $0x38] sm:$0xff]
        %v1239 = vld [vmem:[%s4 + $0x40] sm:$0xff]
        %v1240 = vld [vmem:[%s4 + $0x48] sm:$0xff]
        %v1241 = vld [vmem:[%s4 + $0x50] sm:$0xff]
        %v1242 = vld [vmem:[%s4 + $0x58] sm:$0xff]
        %v1243 = vld [vmem:[%s4 + $0x60] sm:$0xff]
        %v1244 = vld [vmem:[%s4 + $0x68] sm:$0xff]
        %v1245 = vld [vmem:[#allocation2 + $0x1] sm:$0xff]
        %v1246 = vld [vmem:[#allocation2 + $0x9] sm:$0xf]
        %s1247 = scalar_lea.vmem %s4, 112
        %v1248 = vld [vmem:[%s1247] sm:$0xff]
        %v1249 = vld [vmem:[%s1247 + $0x8] sm:$0xff]
        %v1250 = vld [vmem:[%s1247 + $0x10] sm:$0xff]
        %v1251 = vld [vmem:[%s1247 + $0x18] sm:$0xff]
        %v1252 = vld [vmem:[%s1247 + $0x20] sm:$0xff]
        %v1253 = vld [vmem:[%s1247 + $0x28] sm:$0xff]
        %v1254 = vld [vmem:[%s1247 + $0x30] sm:$0xff]
        %v1255 = vld [vmem:[%s1247 + $0x38] sm:$0xff]
        %v1256 = vld [vmem:[%s1247 + $0x40] sm:$0xff]
        %v1257 = vld [vmem:[%s1247 + $0x48] sm:$0xff]
        %v1258 = vld [vmem:[%s1247 + $0x50] sm:$0xff]
        %v1259 = vld [vmem:[%s1247 + $0x58] sm:$0xff]
        %v1260 = vld [vmem:[%s1247 + $0x60] sm:$0xff]
        %v1261 = vld [vmem:[%s1247 + $0x68] sm:$0xff]
        %v1263 = vsel %vm1225, %v1245, 0
        %v1266 = vsel %vm1225, %v1246, 0
        %1268 = vmatprep.subr.mxu0 0.0
        %1269 = vmatpush1.msra.mxu0 %v1248
        %1270 = vmatprep.subr.mxu0 0.0
        %1271 = vmatpush1.msra.mxu0 %v1249
        %1272 = vmatprep.subr.mxu0 0.0
        %1273 = vmatpush1.msra.mxu0 %v1250
        %1274 = vmatprep.subr.mxu0 0.0
        %1275 = vmatpush1.msra.mxu0 %v1251
        %1276 = vmatprep.subr.mxu0 0.0
        %1277 = vmatpush1.msra.mxu0 %v1252
        %1278 = vmatprep.subr.mxu0 0.0
        %1279 = vmatpush1.msra.mxu0 %v1253
        %1280 = vmatprep.subr.mxu0 0.0
        %1281 = vmatpush1.msra.mxu0 %v1254
        %1282 = vmatprep.subr.mxu0 0.0
        %1283 = vmatpush1.msra.mxu0 %v1255
        %1284 = vmatprep.subr.mxu0 0.0
        %1285 = vmatpush1.msra.mxu0 %v1256
        %1286 = vmatprep.subr.mxu0 0.0
        %1287 = vmatpush1.msra.mxu0 %v1257
        %1288 = vmatprep.subr.mxu0 0.0
        %1289 = vmatpush1.msra.mxu0 %v1258
        %1290 = vmatprep.subr.mxu0 0.0
        %1291 = vmatpush1.msra.mxu0 %v1259
        %1292 = vmatprep.subr.mxu0 0.0
        %1293 = vmatpush1.msra.mxu0 %v1260
        %1294 = vmatprep.subr.mxu0 0.0
        %1295 = vmatpush1.msra.mxu0 %v1261
        %1296 = vmatprep.subr.mxu0 0.0
        %1297 = vmatpush1.msra.mxu0 0.0
        %1298 = vmatprep.subr.mxu0 0.0
        %1299 = vmatpush1.msra.mxu0 0.0
        %1300 = vmatprep.subr.mxu0 0.0
        %1301 = vmatpush1.msra.mxu0 0.0
        %1302 = vmatprep.subr.mxu0 0.0
        %1303 = vmatpush1.msra.mxu0 0.0
        %1304 = vmatprep.subr.mxu0 0.0
        %1305 = vmatpush1.msra.mxu0 0.0
        %1306 = vmatprep.subr.mxu0 0.0
        %1307 = vmatpush1.msra.mxu0 0.0
        %1308 = vmatprep.subr.mxu0 0.0
        %1309 = vmatpush1.msra.mxu0 0.0
        %1310 = vmatprep.subr.mxu0 0.0
        %1311 = vmatpush1.msra.mxu0 0.0
        %1312 = vmatprep.subr.mxu0 0.0
        %1313 = vmatpush1.msra.mxu0 0.0
        %1314 = vmatprep.subr.mxu0 0.0
        %1315 = vmatpush1.msra.mxu0 0.0
        %1316 = vmatprep.subr.mxu0 0.0
        %1317 = vmatpush1.msra.mxu0 0.0
        %1318 = vmatprep.subr.mxu0 0.0
        %1319 = vmatpush1.msra.mxu0 0.0
        %1320 = vmatprep.subr.mxu0 0.0
        %1321 = vmatpush1.msra.mxu0 0.0
        %1322 = vmatprep.subr.mxu0 0.0
        %1323 = vmatpush1.msra.mxu0 0.0
        %1324 = vmatprep.subr.mxu0 0.0
        %1325 = vmatpush1.msra.mxu0 0.0
        %1326 = vmatprep.subr.mxu0 0.0
        %1327 = vmatpush1.msra.mxu0 0.0
        %1328 = vmatprep.subr.mxu0 0.0
        %1329 = vmatpush1.msra.mxu0 0.0
        %1330 = vmatprep.subr.mxu0 0.0
        %1331 = vmatpush1.msra.mxu0 0.0
        %1332 = vmatprep.mubr.f32.mxu0 0.0
        %1333 = vmatmul.mubr.f32.gmra.mrb[0].mxu0 %v1263
        %v1334 = vpop.f32.mrb[0].mxu0
        %v1335 = vadd.f32 0.0, %v1334
        %v1336 = vpop.f32.mrb[0].mxu0
        %1337 = vmatprep.mubr.f32.mxu0 0.0
        %1338 = vmatmul.mubr.f32.gmra.mrb[0].mxu0 %v1266
        %v1339 = vpop.f32.mrb[0].mxu0
        %v1340 = vadd.f32 0.0, %v1339
        %v1341 = vpop.f32.mrb[0].mxu0
        %1342 = vdwg.mxu0
        %v1344 = vsel %vm1225, %v1229, 0
        %v1347 = vsel %vm1225, %v1230, 0
        %1349 = vmatprep.subr.mxu0 0.0
        %1350 = vmatpush1.msra.mxu0 %v1231
        %1351 = vmatprep.subr.mxu0 0.0
        %1352 = vmatpush1.msra.mxu0 %v1232
        %1353 = vmatprep.subr.mxu0 0.0
        %1354 = vmatpush1.msra.mxu0 %v1233
        %1355 = vmatprep.subr.mxu0 0.0
        %1356 = vmatpush1.msra.mxu0 %v1234
        %1357 = vmatprep.subr.mxu0 0.0
        %1358 = vmatpush1.msra.mxu0 %v1235
        %1359 = vmatprep.subr.mxu0 0.0
        %1360 = vmatpush1.msra.mxu0 %v1236
        %1361 = vmatprep.subr.mxu0 0.0
        %1362 = vmatpush1.msra.mxu0 %v1237
        %1363 = vmatprep.subr.mxu0 0.0
        %1364 = vmatpush1.msra.mxu0 %v1238
        %1365 = vmatprep.subr.mxu0 0.0
        %1366 = vmatpush1.msra.mxu0 %v1239
        %1367 = vmatprep.subr.mxu0 0.0
        %1368 = vmatpush1.msra.mxu0 %v1240
        %1369 = vmatprep.subr.mxu0 0.0
        %1370 = vmatpush1.msra.mxu0 %v1241
        %1371 = vmatprep.subr.mxu0 0.0
        %1372 = vmatpush1.msra.mxu0 %v1242
        %1373 = vmatprep.subr.mxu0 0.0
        %1374 = vmatpush1.msra.mxu0 %v1243
        %1375 = vmatprep.subr.mxu0 0.0
        %1376 = vmatpush1.msra.mxu0 %v1244
        %1377 = vmatprep.subr.mxu0 0.0
        %1378 = vmatpush1.msra.mxu0 0.0
        %1379 = vmatprep.subr.mxu0 0.0
        %1380 = vmatpush1.msra.mxu0 0.0
        %1381 = vmatprep.subr.mxu0 0.0
        %1382 = vmatpush1.msra.mxu0 0.0
        %1383 = vmatprep.subr.mxu0 0.0
        %1384 = vmatpush1.msra.mxu0 0.0
        %1385 = vmatprep.subr.mxu0 0.0
        %1386 = vmatpush1.msra.mxu0 0.0
        %1387 = vmatprep.subr.mxu0 0.0
        %1388 = vmatpush1.msra.mxu0 0.0
        %1389 = vmatprep.subr.mxu0 0.0
        %1390 = vmatpush1.msra.mxu0 0.0
        %1391 = vmatprep.subr.mxu0 0.0
        %1392 = vmatpush1.msra.mxu0 0.0
        %1393 = vmatprep.subr.mxu0 0.0
        %1394 = vmatpush1.msra.mxu0 0.0
        %1395 = vmatprep.subr.mxu0 0.0
        %1396 = vmatpush1.msra.mxu0 0.0
        %1397 = vmatprep.subr.mxu0 0.0
        %1398 = vmatpush1.msra.mxu0 0.0
        %1399 = vmatprep.subr.mxu0 0.0
        %1400 = vmatpush1.msra.mxu0 0.0
        %1401 = vmatprep.subr.mxu0 0.0
        %1402 = vmatpush1.msra.mxu0 0.0
        %1403 = vmatprep.subr.mxu0 0.0
        %1404 = vmatpush1.msra.mxu0 0.0
        %1405 = vmatprep.subr.mxu0 0.0
        %1406 = vmatpush1.msra.mxu0 0.0
        %1407 = vmatprep.subr.mxu0 0.0
        %1408 = vmatpush1.msra.mxu0 0.0
        %1409 = vmatprep.subr.mxu0 0.0
        %1410 = vmatpush1.msra.mxu0 0.0
        %1411 = vmatprep.subr.mxu0 0.0
        %1412 = vmatpush1.msra.mxu0 0.0
        %1413 = vmatprep.mubr.f32.mxu0 0.0
        %1414 = vmatmul.mubr.f32.gmra.mrb[0].mxu0 %v1344
        %v1415 = vpop.f32.mrb[0].mxu0
        %v1416 = vadd.f32 %v1335, %v1415
        %v1417 = vpop.f32.mrb[0].mxu0
        %1418 = vmatprep.mubr.f32.mxu0 0.0
        %1419 = vmatmul.mubr.f32.gmra.mrb[0].mxu0 %v1347
        %v1420 = vpop.f32.mrb[0].mxu0
        %v1421 = vadd.f32 %v1340, %v1420
        %v1422 = vpop.f32.mrb[0].mxu0
        %1423 = vdwg.mxu0
        %v1424 = vld [vmem:[#allocation2 + $0x2] sm:$0xff]
        %v1425 = vld [vmem:[#allocation2 + $0xa] sm:$0xf]
        %s1426 = scalar_lea.vmem %s4, 224
        %v1427 = vld [vmem:[%s1426] sm:$0xff]
        %v1428 = vld [vmem:[%s1426 + $0x8] sm:$0xff]
        %v1429 = vld [vmem:[%s1426 + $0x10] sm:$0xff]
        %v1430 = vld [vmem:[%s1426 + $0x18] sm:$0xff]
        %v1431 = vld [vmem:[%s1426 + $0x20] sm:$0xff]
        %v1432 = vld [vmem:[%s1426 + $0x28] sm:$0xff]
        %v1433 = vld [vmem:[%s1426 + $0x30] sm:$0xff]
        %v1434 = vld [vmem:[%s1426 + $0x38] sm:$0xff]
        %v1435 = vld [vmem:[%s1426 + $0x40] sm:$0xff]
        %v1436 = vld [vmem:[%s1426 + $0x48] sm:$0xff]
        %v1437 = vld [vmem:[%s1426 + $0x50] sm:$0xff]
        %v1438 = vld [vmem:[%s1426 + $0x58] sm:$0xff]
        %v1439 = vld [vmem:[%s1426 + $0x60] sm:$0xff]
        %v1440 = vld [vmem:[%s1426 + $0x68] sm:$0xff]
        %v1442 = vsel %vm1225, %v1424, 0
        %v1445 = vsel %vm1225, %v1425, 0
        %1447 = vmatprep.subr.mxu0 0.0
        %1448 = vmatpush1.msra.mxu0 %v1427
        %1449 = vmatprep.subr.mxu0 0.0
        %1450 = vmatpush1.msra.mxu0 %v1428
        %1451 = vmatprep.subr.mxu0 0.0
        %1452 = vmatpush1.msra.mxu0 %v1429
        %1453 = vmatprep.subr.mxu0 0.0
        %1454 = vmatpush1.msra.mxu0 %v1430
        %1455 = vmatprep.subr.mxu0 0.0
        %1456 = vmatpush1.msra.mxu0 %v1431
        %1457 = vmatprep.subr.mxu0 0.0
        %1458 = vmatpush1.msra.mxu0 %v1432
        %1459 = vmatprep.subr.mxu0 0.0
        %1460 = vmatpush1.msra.mxu0 %v1433
        %1461 = vmatprep.subr.mxu0 0.0
        %1462 = vmatpush1.msra.mxu0 %v1434
        %1463 = vmatprep.subr.mxu0 0.0
        %1464 = vmatpush1.msra.mxu0 %v1435
        %1465 = vmatprep.subr.mxu0 0.0
        %1466 = vmatpush1.msra.mxu0 %v1436
        %1467 = vmatprep.subr.mxu0 0.0
        %1468 = vmatpush1.msra.mxu0 %v1437
        %1469 = vmatprep.subr.mxu0 0.0
        %1470 = vmatpush1.msra.mxu0 %v1438
        %1471 = vmatprep.subr.mxu0 0.0
        %1472 = vmatpush1.msra.mxu0 %v1439
        %1473 = vmatprep.subr.mxu0 0.0
        %1474 = vmatpush1.msra.mxu0 %v1440
        %1475 = vmatprep.subr.mxu0 0.0
        %1476 = vmatpush1.msra.mxu0 0.0
        %1477 = vmatprep.subr.mxu0 0.0
        %1478 = vmatpush1.msra.mxu0 0.0
        %1479 = vmatprep.subr.mxu0 0.0
        %1480 = vmatpush1.msra.mxu0 0.0
        %1481 = vmatprep.subr.mxu0 0.0
        %1482 = vmatpush1.msra.mxu0 0.0
        %1483 = vmatprep.subr.mxu0 0.0
        %1484 = vmatpush1.msra.mxu0 0.0
        %1485 = vmatprep.subr.mxu0 0.0
        %1486 = vmatpush1.msra.mxu0 0.0
        %1487 = vmatprep.subr.mxu0 0.0
        %1488 = vmatpush1.msra.mxu0 0.0
        %1489 = vmatprep.subr.mxu0 0.0
        %1490 = vmatpush1.msra.mxu0 0.0
        %1491 = vmatprep.subr.mxu0 0.0
        %1492 = vmatpush1.msra.mxu0 0.0
        %1493 = vmatprep.subr.mxu0 0.0
        %1494 = vmatpush1.msra.mxu0 0.0
        %1495 = vmatprep.subr.mxu0 0.0
        %1496 = vmatpush1.msra.mxu0 0.0
        %1497 = vmatprep.subr.mxu0 0.0
        %1498 = vmatpush1.msra.mxu0 0.0
        %1499 = vmatprep.subr.mxu0 0.0
        %1500 = vmatpush1.msra.mxu0 0.0
        %1501 = vmatprep.subr.mxu0 0.0
        %1502 = vmatpush1.msra.mxu0 0.0
        %1503 = vmatprep.subr.mxu0 0.0
        %1504 = vmatpush1.msra.mxu0 0.0
        %1505 = vmatprep.subr.mxu0 0.0
        %1506 = vmatpush1.msra.mxu0 0.0
        %1507 = vmatprep.subr.mxu0 0.0
        %1508 = vmatpush1.msra.mxu0 0.0
        %1509 = vmatprep.subr.mxu0 0.0
        %1510 = vmatpush1.msra.mxu0 0.0
        %1511 = vmatprep.mubr.f32.mxu0 0.0
        %1512 = vmatmul.mubr.f32.gmra.mrb[0].mxu0 %v1442
        %v1513 = vpop.f32.mrb[0].mxu0
        %v1514 = vadd.f32 0.0, %v1513
        %v1515 = vpop.f32.mrb[0].mxu0
        %1516 = vmatprep.mubr.f32.mxu0 0.0
        %1517 = vmatmul.mubr.f32.gmra.mrb[0].mxu0 %v1445
        %v1518 = vpop.f32.mrb[0].mxu0
        %v1519 = vadd.f32 0.0, %v1518
        %v1520 = vpop.f32.mrb[0].mxu0
        %1521 = vdwg.mxu0
        %v1522 = vadd.f32 %v1416, %v1514
        %v1523 = vadd.f32 %v1421, %v1519
        %v1524 = vmax.f32 %v1522, 0.0
        %v1525 = vmax.f32 %v1523, 0.0
        %v1526 = vld [vmem:[%s6] sm:$0x3f]
        %v1527 = vld [vmem:[%s5] sm:$0xff]
        %v1528 = vld [vmem:[%s5 + $0x8] sm:$0xff]
        %v1529 = vld [vmem:[%s5 + $0x10] sm:$0xff]
        %v1530 = vld [vmem:[%s5 + $0x18] sm:$0xff]
        %v1531 = vld [vmem:[%s5 + $0x20] sm:$0xff]
        %v1532 = vld [vmem:[%s5 + $0x28] sm:$0xff]
        %v1533 = vld [vmem:[%s5 + $0x30] sm:$0xff]
        %v1534 = vld [vmem:[%s5 + $0x38] sm:$0xff]
        %v1535 = vld [vmem:[%s5 + $0x40] sm:$0xff]
        %v1536 = vld [vmem:[%s5 + $0x48] sm:$0xff]
        %v1537 = vld [vmem:[%s5 + $0x50] sm:$0xff]
        %v1538 = vld [vmem:[%s5 + $0x58] sm:$0xff]
        %v1540 = vsel %vm387, %v1524, 0
        %v1543 = vsel %vm387, %v1525, 0
        %1545 = vmatprep.subr.mxu0 0.0
        %1546 = vmatpush1.msra.mxu0 %v1527
        %1547 = vmatprep.subr.mxu0 0.0
        %1548 = vmatpush1.msra.mxu0 %v1528
        %1549 = vmatprep.subr.mxu0 0.0
        %1550 = vmatpush1.msra.mxu0 %v1529
        %1551 = vmatprep.subr.mxu0 0.0
        %1552 = vmatpush1.msra.mxu0 %v1530
        %1553 = vmatprep.subr.mxu0 0.0
        %1554 = vmatpush1.msra.mxu0 %v1531
        %1555 = vmatprep.subr.mxu0 0.0
        %1556 = vmatpush1.msra.mxu0 %v1532
        %1557 = vmatprep.subr.mxu0 0.0
        %1558 = vmatpush1.msra.mxu0 %v1533
        %1559 = vmatprep.subr.mxu0 0.0
        %1560 = vmatpush1.msra.mxu0 %v1534
        %1561 = vmatprep.subr.mxu0 0.0
        %1562 = vmatpush1.msra.mxu0 %v1535
        %1563 = vmatprep.subr.mxu0 0.0
        %1564 = vmatpush1.msra.mxu0 %v1536
        %1565 = vmatprep.subr.mxu0 0.0
        %1566 = vmatpush1.msra.mxu0 %v1537
        %1567 = vmatprep.subr.mxu0 0.0
        %1568 = vmatpush1.msra.mxu0 %v1538
        %1569 = vmatprep.subr.mxu0 0.0
        %1570 = vmatpush1.msra.mxu0 0.0
        %1571 = vmatprep.subr.mxu0 0.0
        %1572 = vmatpush1.msra.mxu0 0.0
        %1573 = vmatprep.subr.mxu0 0.0
        %1574 = vmatpush1.msra.mxu0 0.0
        %1575 = vmatprep.subr.mxu0 0.0
        %1576 = vmatpush1.msra.mxu0 0.0
        %1577 = vmatprep.subr.mxu0 0.0
        %1578 = vmatpush1.msra.mxu0 0.0
        %1579 = vmatprep.subr.mxu0 0.0
        %1580 = vmatpush1.msra.mxu0 0.0
        %1581 = vmatprep.subr.mxu0 0.0
        %1582 = vmatpush1.msra.mxu0 0.0
        %1583 = vmatprep.subr.mxu0 0.0
        %1584 = vmatpush1.msra.mxu0 0.0
        %1585 = vmatprep.subr.mxu0 0.0
        %1586 = vmatpush1.msra.mxu0 0.0
        %1587 = vmatprep.subr.mxu0 0.0
        %1588 = vmatpush1.msra.mxu0 0.0
        %1589 = vmatprep.subr.mxu0 0.0
        %1590 = vmatpush1.msra.mxu0 0.0
        %1591 = vmatprep.subr.mxu0 0.0
        %1592 = vmatpush1.msra.mxu0 0.0
        %1593 = vmatprep.subr.mxu0 0.0
        %1594 = vmatpush1.msra.mxu0 0.0
        %1595 = vmatprep.subr.mxu0 0.0
        %1596 = vmatpush1.msra.mxu0 0.0
        %1597 = vmatprep.subr.mxu0 0.0
        %1598 = vmatpush1.msra.mxu0 0.0
        %1599 = vmatprep.subr.mxu0 0.0
        %1600 = vmatpush1.msra.mxu0 0.0
        %1601 = vmatprep.subr.mxu0 0.0
        %1602 = vmatpush1.msra.mxu0 0.0
        %1603 = vmatprep.subr.mxu0 0.0
        %1604 = vmatpush1.msra.mxu0 0.0
        %1605 = vmatprep.subr.mxu0 0.0
        %1606 = vmatpush1.msra.mxu0 0.0
        %1607 = vmatprep.subr.mxu0 0.0
        %1608 = vmatpush1.msra.mxu0 0.0
        %1609 = vmatprep.mubr.f32.mxu0 0.0
        %1610 = vmatmul.mubr.f32.gmra.mrb[0].mxu0 %v1540
        %v1611 = vpop.f32.mrb[0].mxu0
        %v1612 = vadd.f32 0.0, %v1611
        %v1613 = vpop.f32.mrb[0].mxu0
        %1614 = vmatprep.mubr.f32.mxu0 0.0
        %1615 = vmatmul.mubr.f32.gmra.mrb[0].mxu0 %v1543
        %v1616 = vpop.f32.mrb[0].mxu0
        %v1617 = vadd.f32 0.0, %v1616
        %v1618 = vpop.f32.mrb[0].mxu0
        %1619 = vdwg.mxu0
        %vm1620 = vcmask 97280
        %v1622 = vsel %vm1620, %v1526, 0
        %v1625 = vsel %vm1146, %v1617, 0
        %1627 = vmatprep.subr.mxu0 0.0
        %1628 = vmatpush1.msra.mxu0 %v1612
        %1629 = vmatprep.subr.mxu0 0.0
        %1630 = vmatpush1.msra.mxu0 %v1625
        %1631 = vmatprep.subr.mxu0 0.0
        %1632 = vmatpush1.msra.mxu0 0.0
        %1633 = vmatprep.subr.mxu0 0.0
        %1634 = vmatpush1.msra.mxu0 0.0
        %1635 = vmatprep.subr.mxu0 0.0
        %1636 = vmatpush1.msra.mxu0 0.0
        %1637 = vmatprep.subr.mxu0 0.0
        %1638 = vmatpush1.msra.mxu0 0.0
        %1639 = vmatprep.subr.mxu0 0.0
        %1640 = vmatpush1.msra.mxu0 0.0
        %1641 = vmatprep.subr.mxu0 0.0
        %1642 = vmatpush1.msra.mxu0 0.0
        %1643 = vmatprep.subr.mxu0 0.0
        %1644 = vmatpush1.msra.mxu0 0.0
        %1645 = vmatprep.subr.mxu0 0.0
        %1646 = vmatpush1.msra.mxu0 0.0
        %1647 = vmatprep.subr.mxu0 0.0
        %1648 = vmatpush1.msra.mxu0 0.0
        %1649 = vmatprep.subr.mxu0 0.0
        %1650 = vmatpush1.msra.mxu0 0.0
        %1651 = vmatprep.subr.mxu0 0.0
        %1652 = vmatpush1.msra.mxu0 0.0
        %1653 = vmatprep.subr.mxu0 0.0
        %1654 = vmatpush1.msra.mxu0 0.0
        %1655 = vmatprep.subr.mxu0 0.0
        %1656 = vmatpush1.msra.mxu0 0.0
        %1657 = vmatprep.subr.mxu0 0.0
        %1658 = vmatpush1.msra.mxu0 0.0
        %1659 = vmatprep.subr.mxu0 0.0
        %1660 = vmatpush1.msra.mxu0 0.0
        %1661 = vmatprep.subr.mxu0 0.0
        %1662 = vmatpush1.msra.mxu0 0.0
        %1663 = vmatprep.subr.mxu0 0.0
        %1664 = vmatpush1.msra.mxu0 0.0
        %1665 = vmatprep.subr.mxu0 0.0
        %1666 = vmatpush1.msra.mxu0 0.0
        %1667 = vmatprep.subr.mxu0 0.0
        %1668 = vmatpush1.msra.mxu0 0.0
        %1669 = vmatprep.subr.mxu0 0.0
        %1670 = vmatpush1.msra.mxu0 0.0
        %1671 = vmatprep.subr.mxu0 0.0
        %1672 = vmatpush1.msra.mxu0 0.0
        %1673 = vmatprep.subr.mxu0 0.0
        %1674 = vmatpush1.msra.mxu0 0.0
        %1675 = vmatprep.subr.mxu0 0.0
        %1676 = vmatpush1.msra.mxu0 0.0
        %1677 = vmatprep.subr.mxu0 0.0
        %1678 = vmatpush1.msra.mxu0 0.0
        %1679 = vmatprep.subr.mxu0 0.0
        %1680 = vmatpush1.msra.mxu0 0.0
        %1681 = vmatprep.subr.mxu0 0.0
        %1682 = vmatpush1.msra.mxu0 0.0
        %1683 = vmatprep.subr.mxu0 0.0
        %1684 = vmatpush1.msra.mxu0 0.0
        %1685 = vmatprep.subr.mxu0 0.0
        %1686 = vmatpush1.msra.mxu0 0.0
        %1687 = vmatprep.subr.mxu0 0.0
        %1688 = vmatpush1.msra.mxu0 0.0
        %1689 = vmatprep.subr.mxu0 0.0
        %1690 = vmatpush1.msra.mxu0 0.0
        %1691 = vmatprep.mubr.f32.mxu0 0.0
        %1692 = vmatmul.mubr.f32.gmra.mrb[0].mxu0 %v1622
        %v1693 = vpop.f32.mrb[0].mxu0
        %v1694 = vadd.f32 0.0, %v1693
        %v1695 = vpop.f32.mrb[0].mxu0
        %1696 = vdwg.mxu0
        %vm1697 = vcmask 390144
        %1698 = vst.msk [vmem:[#allocation3] sm:$0x3f] %vm1697, %v1694
        %v1699 = vld [vmem:[#allocation3] sm:$0xf]
        %v1700 = vld [vmem:[%s7] sm:$0xff]
        %v1701 = vld [vmem:[%s7 + $0x8] sm:$0xff]
        %v1702 = vld [vmem:[%s7 + $0x10] sm:$0xff]
        %v1703 = vld [vmem:[%s7 + $0x18] sm:$0xff]
        %v1704 = vld [vmem:[%s7 + $0x20] sm:$0xff]
        %v1705 = vld [vmem:[%s7 + $0x28] sm:$0xff]
        %v1706 = vld [vmem:[#allocation3 + $0x1] sm:$0xf]
        %s1707 = scalar_lea.vmem %s7, 48
        %v1708 = vld [vmem:[%s1707] sm:$0xff]
        %v1709 = vld [vmem:[%s1707 + $0x8] sm:$0xff]
        %v1710 = vld [vmem:[%s1707 + $0x10] sm:$0xff]
        %v1711 = vld [vmem:[%s1707 + $0x18] sm:$0xff]
        %v1712 = vld [vmem:[%s1707 + $0x20] sm:$0xff]
        %v1713 = vld [vmem:[%s1707 + $0x28] sm:$0xff]
        %vm1714 = vcmask 392192
        %v1716 = vsel %vm1714, %v1706, 0
        %1718 = vmatprep.subr.mxu0 0.0
        %1719 = vmatpush1.msra.mxu0 %v1708
        %1720 = vmatprep.subr.mxu0 0.0
        %1721 = vmatpush1.msra.mxu0 %v1709
        %1722 = vmatprep.subr.mxu0 0.0
        %1723 = vmatpush1.msra.mxu0 %v1710
        %1724 = vmatprep.subr.mxu0 0.0
        %1725 = vmatpush1.msra.mxu0 %v1711
        %1726 = vmatprep.subr.mxu0 0.0
        %1727 = vmatpush1.msra.mxu0 %v1712
        %1728 = vmatprep.subr.mxu0 0.0
        %1729 = vmatpush1.msra.mxu0 %v1713
        %1730 = vmatprep.subr.mxu0 0.0
        %1731 = vmatpush1.msra.mxu0 0.0
        %1732 = vmatprep.subr.mxu0 0.0
        %1733 = vmatpush1.msra.mxu0 0.0
        %1734 = vmatprep.subr.mxu0 0.0
        %1735 = vmatpush1.msra.mxu0 0.0
        %1736 = vmatprep.subr.mxu0 0.0
        %1737 = vmatpush1.msra.mxu0 0.0
        %1738 = vmatprep.subr.mxu0 0.0
        %1739 = vmatpush1.msra.mxu0 0.0
        %1740 = vmatprep.subr.mxu0 0.0
        %1741 = vmatpush1.msra.mxu0 0.0
        %1742 = vmatprep.subr.mxu0 0.0
        %1743 = vmatpush1.msra.mxu0 0.0
        %1744 = vmatprep.subr.mxu0 0.0
        %1745 = vmatpush1.msra.mxu0 0.0
        %1746 = vmatprep.subr.mxu0 0.0
        %1747 = vmatpush1.msra.mxu0 0.0
        %1748 = vmatprep.subr.mxu0 0.0
        %1749 = vmatpush1.msra.mxu0 0.0
        %1750 = vmatprep.subr.mxu0 0.0
        %1751 = vmatpush1.msra.mxu0 0.0
        %1752 = vmatprep.subr.mxu0 0.0
        %1753 = vmatpush1.msra.mxu0 0.0
        %1754 = vmatprep.subr.mxu0 0.0
        %1755 = vmatpush1.msra.mxu0 0.0
        %1756 = vmatprep.subr.mxu0 0.0
        %1757 = vmatpush1.msra.mxu0 0.0
        %1758 = vmatprep.subr.mxu0 0.0
        %1759 = vmatpush1.msra.mxu0 0.0
        %1760 = vmatprep.subr.mxu0 0.0
        %1761 = vmatpush1.msra.mxu0 0.0
        %1762 = vmatprep.subr.mxu0 0.0
        %1763 = vmatpush1.msra.mxu0 0.0
        %1764 = vmatprep.subr.mxu0 0.0
        %1765 = vmatpush1.msra.mxu0 0.0
        %1766 = vmatprep.subr.mxu0 0.0
        %1767 = vmatpush1.msra.mxu0 0.0
        %1768 = vmatprep.subr.mxu0 0.0
        %1769 = vmatpush1.msra.mxu0 0.0
        %1770 = vmatprep.subr.mxu0 0.0
        %1771 = vmatpush1.msra.mxu0 0.0
        %1772 = vmatprep.subr.mxu0 0.0
        %1773 = vmatpush1.msra.mxu0 0.0
        %1774 = vmatprep.subr.mxu0 0.0
        %1775 = vmatpush1.msra.mxu0 0.0
        %1776 = vmatprep.subr.mxu0 0.0
        %1777 = vmatpush1.msra.mxu0 0.0
        %1778 = vmatprep.subr.mxu0 0.0
        %1779 = vmatpush1.msra.mxu0 0.0
        %1780 = vmatprep.subr.mxu0 0.0
        %1781 = vmatpush1.msra.mxu0 0.0
        %1782 = vmatprep.mubr.f32.mxu0 0.0
        %1783 = vmatmul.mubr.f32.gmra.mrb[0].mxu0 %v1716
        %v1784 = vpop.f32.mrb[0].mxu0
        %v1785 = vadd.f32 0.0, %v1784
        %v1786 = vpop.f32.mrb[0].mxu0
        %1787 = vdwg.mxu0
        %v1789 = vsel %vm1714, %v1699, 0
        %1791 = vmatprep.subr.mxu0 0.0
        %1792 = vmatpush1.msra.mxu0 %v1700
        %1793 = vmatprep.subr.mxu0 0.0
        %1794 = vmatpush1.msra.mxu0 %v1701
        %1795 = vmatprep.subr.mxu0 0.0
        %1796 = vmatpush1.msra.mxu0 %v1702
        %1797 = vmatprep.subr.mxu0 0.0
        %1798 = vmatpush1.msra.mxu0 %v1703
        %1799 = vmatprep.subr.mxu0 0.0
        %1800 = vmatpush1.msra.mxu0 %v1704
        %1801 = vmatprep.subr.mxu0 0.0
        %1802 = vmatpush1.msra.mxu0 %v1705
        %1803 = vmatprep.subr.mxu0 0.0
        %1804 = vmatpush1.msra.mxu0 0.0
        %1805 = vmatprep.subr.mxu0 0.0
        %1806 = vmatpush1.msra.mxu0 0.0
        %1807 = vmatprep.subr.mxu0 0.0
        %1808 = vmatpush1.msra.mxu0 0.0
        %1809 = vmatprep.subr.mxu0 0.0
        %1810 = vmatpush1.msra.mxu0 0.0
        %1811 = vmatprep.subr.mxu0 0.0
        %1812 = vmatpush1.msra.mxu0 0.0
        %1813 = vmatprep.subr.mxu0 0.0
        %1814 = vmatpush1.msra.mxu0 0.0
        %1815 = vmatprep.subr.mxu0 0.0
        %1816 = vmatpush1.msra.mxu0 0.0
        %1817 = vmatprep.subr.mxu0 0.0
        %1818 = vmatpush1.msra.mxu0 0.0
        %1819 = vmatprep.subr.mxu0 0.0
        %1820 = vmatpush1.msra.mxu0 0.0
        %1821 = vmatprep.subr.mxu0 0.0
        %1822 = vmatpush1.msra.mxu0 0.0
        %1823 = vmatprep.subr.mxu0 0.0
        %1824 = vmatpush1.msra.mxu0 0.0
        %1825 = vmatprep.subr.mxu0 0.0
        %1826 = vmatpush1.msra.mxu0 0.0
        %1827 = vmatprep.subr.mxu0 0.0
        %1828 = vmatpush1.msra.mxu0 0.0
        %1829 = vmatprep.subr.mxu0 0.0
        %1830 = vmatpush1.msra.mxu0 0.0
        %1831 = vmatprep.subr.mxu0 0.0
        %1832 = vmatpush1.msra.mxu0 0.0
        %1833 = vmatprep.subr.mxu0 0.0
        %1834 = vmatpush1.msra.mxu0 0.0
        %1835 = vmatprep.subr.mxu0 0.0
        %1836 = vmatpush1.msra.mxu0 0.0
        %1837 = vmatprep.subr.mxu0 0.0
        %1838 = vmatpush1.msra.mxu0 0.0
        %1839 = vmatprep.subr.mxu0 0.0
        %1840 = vmatpush1.msra.mxu0 0.0
        %1841 = vmatprep.subr.mxu0 0.0
        %1842 = vmatpush1.msra.mxu0 0.0
        %1843 = vmatprep.subr.mxu0 0.0
        %1844 = vmatpush1.msra.mxu0 0.0
        %1845 = vmatprep.subr.mxu0 0.0
        %1846 = vmatpush1.msra.mxu0 0.0
        %1847 = vmatprep.subr.mxu0 0.0
        %1848 = vmatpush1.msra.mxu0 0.0
        %1849 = vmatprep.subr.mxu0 0.0
        %1850 = vmatpush1.msra.mxu0 0.0
        %1851 = vmatprep.subr.mxu0 0.0
        %1852 = vmatpush1.msra.mxu0 0.0
        %1853 = vmatprep.subr.mxu0 0.0
        %1854 = vmatpush1.msra.mxu0 0.0
        %1855 = vmatprep.mubr.f32.mxu0 0.0
        %1856 = vmatmul.mubr.f32.gmra.mrb[0].mxu0 %v1789
        %v1857 = vpop.f32.mrb[0].mxu0
        %v1858 = vadd.f32 %v1785, %v1857
        %v1859 = vpop.f32.mrb[0].mxu0
        %1860 = vdwg.mxu0
        %v1861 = vld [vmem:[#allocation3 + $0x2] sm:$0xf]
        %s1862 = scalar_lea.vmem %s7, 96
        %v1863 = vld [vmem:[%s1862] sm:$0xff]
        %v1864 = vld [vmem:[%s1862 + $0x8] sm:$0xff]
        %v1865 = vld [vmem:[%s1862 + $0x10] sm:$0xff]
        %v1866 = vld [vmem:[%s1862 + $0x18] sm:$0xff]
        %v1867 = vld [vmem:[%s1862 + $0x20] sm:$0xff]
        %v1868 = vld [vmem:[%s1862 + $0x28] sm:$0xff]
        %v1870 = vsel %vm1714, %v1861, 0
        %1872 = vmatprep.subr.mxu0 0.0
        %1873 = vmatpush1.msra.mxu0 %v1863
        %1874 = vmatprep.subr.mxu0 0.0
        %1875 = vmatpush1.msra.mxu0 %v1864
        %1876 = vmatprep.subr.mxu0 0.0
        %1877 = vmatpush1.msra.mxu0 %v1865
        %1878 = vmatprep.subr.mxu0 0.0
        %1879 = vmatpush1.msra.mxu0 %v1866
        %1880 = vmatprep.subr.mxu0 0.0
        %1881 = vmatpush1.msra.mxu0 %v1867
        %1882 = vmatprep.subr.mxu0 0.0
        %1883 = vmatpush1.msra.mxu0 %v1868
        %1884 = vmatprep.subr.mxu0 0.0
        %1885 = vmatpush1.msra.mxu0 0.0
        %1886 = vmatprep.subr.mxu0 0.0
        %1887 = vmatpush1.msra.mxu0 0.0
        %1888 = vmatprep.subr.mxu0 0.0
        %1889 = vmatpush1.msra.mxu0 0.0
        %1890 = vmatprep.subr.mxu0 0.0
        %1891 = vmatpush1.msra.mxu0 0.0
        %1892 = vmatprep.subr.mxu0 0.0
        %1893 = vmatpush1.msra.mxu0 0.0
        %1894 = vmatprep.subr.mxu0 0.0
        %1895 = vmatpush1.msra.mxu0 0.0
        %1896 = vmatprep.subr.mxu0 0.0
        %1897 = vmatpush1.msra.mxu0 0.0
        %1898 = vmatprep.subr.mxu0 0.0
        %1899 = vmatpush1.msra.mxu0 0.0
        %1900 = vmatprep.subr.mxu0 0.0
        %1901 = vmatpush1.msra.mxu0 0.0
        %1902 = vmatprep.subr.mxu0 0.0
        %1903 = vmatpush1.msra.mxu0 0.0
        %1904 = vmatprep.subr.mxu0 0.0
        %1905 = vmatpush1.msra.mxu0 0.0
        %1906 = vmatprep.subr.mxu0 0.0
        %1907 = vmatpush1.msra.mxu0 0.0
        %1908 = vmatprep.subr.mxu0 0.0
        %1909 = vmatpush1.msra.mxu0 0.0
        %1910 = vmatprep.subr.mxu0 0.0
        %1911 = vmatpush1.msra.mxu0 0.0
        %1912 = vmatprep.subr.mxu0 0.0
        %1913 = vmatpush1.msra.mxu0 0.0
        %1914 = vmatprep.subr.mxu0 0.0
        %1915 = vmatpush1.msra.mxu0 0.0
        %1916 = vmatprep.subr.mxu0 0.0
        %1917 = vmatpush1.msra.mxu0 0.0
        %1918 = vmatprep.subr.mxu0 0.0
        %1919 = vmatpush1.msra.mxu0 0.0
        %1920 = vmatprep.subr.mxu0 0.0
        %1921 = vmatpush1.msra.mxu0 0.0
        %1922 = vmatprep.subr.mxu0 0.0
        %1923 = vmatpush1.msra.mxu0 0.0
        %1924 = vmatprep.subr.mxu0 0.0
        %1925 = vmatpush1.msra.mxu0 0.0
        %1926 = vmatprep.subr.mxu0 0.0
        %1927 = vmatpush1.msra.mxu0 0.0
        %1928 = vmatprep.subr.mxu0 0.0
        %1929 = vmatpush1.msra.mxu0 0.0
        %1930 = vmatprep.subr.mxu0 0.0
        %1931 = vmatpush1.msra.mxu0 0.0
        %1932 = vmatprep.subr.mxu0 0.0
        %1933 = vmatpush1.msra.mxu0 0.0
        %1934 = vmatprep.subr.mxu0 0.0
        %1935 = vmatpush1.msra.mxu0 0.0
        %1936 = vmatprep.mubr.f32.mxu0 0.0
        %1937 = vmatmul.mubr.f32.gmra.mrb[0].mxu0 %v1870
        %v1938 = vpop.f32.mrb[0].mxu0
        %v1939 = vadd.f32 0.0, %v1938
        %v1940 = vpop.f32.mrb[0].mxu0
        %1941 = vdwg.mxu0
        %v1942 = vadd.f32 %v1858, %v1939
        %v1943 = vmax.f32 %v1942, 0.0
        %vm1944 = vcmask 257024
        %1945 = vst.msk [vmem:[#allocation4] sm:$0xf] %vm1944, %v1943
        %v1946 = vld [vmem:[#allocation4] sm:$0x1]
        %v1947 = vld [vmem:[%s8] sm:$0xff]
        %v1948 = vld [vmem:[%s8 + $0x8] sm:$0xff]
        %v1949 = vld [vmem:[%s8 + $0x10] sm:$0xff]
        %v1950 = vld [vmem:[%s8 + $0x18] sm:$0xff]
        %v1951 = vld [vmem:[#allocation4 + $0x1] sm:$0x1]
        %s1952 = scalar_lea.vmem %s8, 32
        %v1953 = vld [vmem:[%s1952] sm:$0xff]
        %v1954 = vld [vmem:[%s1952 + $0x8] sm:$0xff]
        %v1955 = vld [vmem:[%s1952 + $0x10] sm:$0xff]
        %v1956 = vld [vmem:[%s1952 + $0x18] sm:$0xff]
        %vm1957 = vcmask 261120
        %v1959 = vsel %vm1957, %v1951, 0
        %1961 = vmatprep.subr.mxu0 0.0
        %1962 = vmatpush1.msra.mxu0 %v1953
        %1963 = vmatprep.subr.mxu0 0.0
        %1964 = vmatpush1.msra.mxu0 %v1954
        %1965 = vmatprep.subr.mxu0 0.0
        %1966 = vmatpush1.msra.mxu0 %v1955
        %1967 = vmatprep.subr.mxu0 0.0
        %1968 = vmatpush1.msra.mxu0 %v1956
        %1969 = vmatprep.subr.mxu0 0.0
        %1970 = vmatpush1.msra.mxu0 0.0
        %1971 = vmatprep.subr.mxu0 0.0
        %1972 = vmatpush1.msra.mxu0 0.0
        %1973 = vmatprep.subr.mxu0 0.0
        %1974 = vmatpush1.msra.mxu0 0.0
        %1975 = vmatprep.subr.mxu0 0.0
        %1976 = vmatpush1.msra.mxu0 0.0
        %1977 = vmatprep.subr.mxu0 0.0
        %1978 = vmatpush1.msra.mxu0 0.0
        %1979 = vmatprep.subr.mxu0 0.0
        %1980 = vmatpush1.msra.mxu0 0.0
        %1981 = vmatprep.subr.mxu0 0.0
        %1982 = vmatpush1.msra.mxu0 0.0
        %1983 = vmatprep.subr.mxu0 0.0
        %1984 = vmatpush1.msra.mxu0 0.0
        %1985 = vmatprep.subr.mxu0 0.0
        %1986 = vmatpush1.msra.mxu0 0.0
        %1987 = vmatprep.subr.mxu0 0.0
        %1988 = vmatpush1.msra.mxu0 0.0
        %1989 = vmatprep.subr.mxu0 0.0
        %1990 = vmatpush1.msra.mxu0 0.0
        %1991 = vmatprep.subr.mxu0 0.0
        %1992 = vmatpush1.msra.mxu0 0.0
        %1993 = vmatprep.subr.mxu0 0.0
        %1994 = vmatpush1.msra.mxu0 0.0
        %1995 = vmatprep.subr.mxu0 0.0
        %1996 = vmatpush1.msra.mxu0 0.0
        %1997 = vmatprep.subr.mxu0 0.0
        %1998 = vmatpush1.msra.mxu0 0.0
        %1999 = vmatprep.subr.mxu0 0.0
        %2000 = vmatpush1.msra.mxu0 0.0
        %2001 = vmatprep.subr.mxu0 0.0
        %2002 = vmatpush1.msra.mxu0 0.0
        %2003 = vmatprep.subr.mxu0 0.0
        %2004 = vmatpush1.msra.mxu0 0.0
        %2005 = vmatprep.subr.mxu0 0.0
        %2006 = vmatpush1.msra.mxu0 0.0
        %2007 = vmatprep.subr.mxu0 0.0
        %2008 = vmatpush1.msra.mxu0 0.0
        %2009 = vmatprep.subr.mxu0 0.0
        %2010 = vmatpush1.msra.mxu0 0.0
        %2011 = vmatprep.subr.mxu0 0.0
        %2012 = vmatpush1.msra.mxu0 0.0
        %2013 = vmatprep.subr.mxu0 0.0
        %2014 = vmatpush1.msra.mxu0 0.0
        %2015 = vmatprep.subr.mxu0 0.0
        %2016 = vmatpush1.msra.mxu0 0.0
        %2017 = vmatprep.subr.mxu0 0.0
        %2018 = vmatpush1.msra.mxu0 0.0
        %2019 = vmatprep.subr.mxu0 0.0
        %2020 = vmatpush1.msra.mxu0 0.0
        %2021 = vmatprep.subr.mxu0 0.0
        %2022 = vmatpush1.msra.mxu0 0.0
        %2023 = vmatprep.subr.mxu0 0.0
        %2024 = vmatpush1.msra.mxu0 0.0
        %2025 = vmatprep.mubr.f32.mxu0 0.0
        %2026 = vmatmul.mubr.f32.gmra.mrb[0].mxu0 %v1959
        %v2027 = vpop.f32.mrb[0].mxu0
        %v2028 = vadd.f32 0.0, %v2027
        %v2029 = vpop.f32.mrb[0].mxu0
        %2030 = vdwg.mxu0
        %v2032 = vsel %vm1957, %v1946, 0
        %2034 = vmatprep.subr.mxu0 0.0
        %2035 = vmatpush1.msra.mxu0 %v1947
        %2036 = vmatprep.subr.mxu0 0.0
        %2037 = vmatpush1.msra.mxu0 %v1948
        %2038 = vmatprep.subr.mxu0 0.0
        %2039 = vmatpush1.msra.mxu0 %v1949
        %2040 = vmatprep.subr.mxu0 0.0
        %2041 = vmatpush1.msra.mxu0 %v1950
        %2042 = vmatprep.subr.mxu0 0.0
        %2043 = vmatpush1.msra.mxu0 0.0
        %2044 = vmatprep.subr.mxu0 0.0
        %2045 = vmatpush1.msra.mxu0 0.0
        %2046 = vmatprep.subr.mxu0 0.0
        %2047 = vmatpush1.msra.mxu0 0.0
        %2048 = vmatprep.subr.mxu0 0.0
        %2049 = vmatpush1.msra.mxu0 0.0
        %2050 = vmatprep.subr.mxu0 0.0
        %2051 = vmatpush1.msra.mxu0 0.0
        %2052 = vmatprep.subr.mxu0 0.0
        %2053 = vmatpush1.msra.mxu0 0.0
        %2054 = vmatprep.subr.mxu0 0.0
        %2055 = vmatpush1.msra.mxu0 0.0
        %2056 = vmatprep.subr.mxu0 0.0
        %2057 = vmatpush1.msra.mxu0 0.0
        %2058 = vmatprep.subr.mxu0 0.0
        %2059 = vmatpush1.msra.mxu0 0.0
        %2060 = vmatprep.subr.mxu0 0.0
        %2061 = vmatpush1.msra.mxu0 0.0
        %2062 = vmatprep.subr.mxu0 0.0
        %2063 = vmatpush1.msra.mxu0 0.0
        %2064 = vmatprep.subr.mxu0 0.0
        %2065 = vmatpush1.msra.mxu0 0.0
        %2066 = vmatprep.subr.mxu0 0.0
        %2067 = vmatpush1.msra.mxu0 0.0
        %2068 = vmatprep.subr.mxu0 0.0
        %2069 = vmatpush1.msra.mxu0 0.0
        %2070 = vmatprep.subr.mxu0 0.0
        %2071 = vmatpush1.msra.mxu0 0.0
        %2072 = vmatprep.subr.mxu0 0.0
        %2073 = vmatpush1.msra.mxu0 0.0
        %2074 = vmatprep.subr.mxu0 0.0
        %2075 = vmatpush1.msra.mxu0 0.0
        %2076 = vmatprep.subr.mxu0 0.0
        %2077 = vmatpush1.msra.mxu0 0.0
        %2078 = vmatprep.subr.mxu0 0.0
        %2079 = vmatpush1.msra.mxu0 0.0
        %2080 = vmatprep.subr.mxu0 0.0
        %2081 = vmatpush1.msra.mxu0 0.0
        %2082 = vmatprep.subr.mxu0 0.0
        %2083 = vmatpush1.msra.mxu0 0.0
        %2084 = vmatprep.subr.mxu0 0.0
        %2085 = vmatpush1.msra.mxu0 0.0
        %2086 = vmatprep.subr.mxu0 0.0
        %2087 = vmatpush1.msra.mxu0 0.0
        %2088 = vmatprep.subr.mxu0 0.0
        %2089 = vmatpush1.msra.mxu0 0.0
        %2090 = vmatprep.subr.mxu0 0.0
        %2091 = vmatpush1.msra.mxu0 0.0
        %2092 = vmatprep.subr.mxu0 0.0
        %2093 = vmatpush1.msra.mxu0 0.0
        %2094 = vmatprep.subr.mxu0 0.0
        %2095 = vmatpush1.msra.mxu0 0.0
        %2096 = vmatprep.subr.mxu0 0.0
        %2097 = vmatpush1.msra.mxu0 0.0
        %2098 = vmatprep.mubr.f32.mxu0 0.0
        %2099 = vmatmul.mubr.f32.gmra.mrb[0].mxu0 %v2032
        %v2100 = vpop.f32.mrb[0].mxu0
        %v2101 = vadd.f32 %v2028, %v2100
        %v2102 = vpop.f32.mrb[0].mxu0
        %2103 = vdwg.mxu0
        %v2104 = vld [vmem:[#allocation4 + $0x2] sm:$0x1]
        %s2105 = scalar_lea.vmem %s8, 64
        %v2106 = vld [vmem:[%s2105] sm:$0xff]
        %v2107 = vld [vmem:[%s2105 + $0x8] sm:$0xff]
        %v2108 = vld [vmem:[%s2105 + $0x10] sm:$0xff]
        %v2109 = vld [vmem:[%s2105 + $0x18] sm:$0xff]
        %v2111 = vsel %vm1957, %v2104, 0
        %2113 = vmatprep.subr.mxu0 0.0
        %2114 = vmatpush1.msra.mxu0 %v2106
        %2115 = vmatprep.subr.mxu0 0.0
        %2116 = vmatpush1.msra.mxu0 %v2107
        %2117 = vmatprep.subr.mxu0 0.0
        %2118 = vmatpush1.msra.mxu0 %v2108
        %2119 = vmatprep.subr.mxu0 0.0
        %2120 = vmatpush1.msra.mxu0 %v2109
        %2121 = vmatprep.subr.mxu0 0.0
        %2122 = vmatpush1.msra.mxu0 0.0
        %2123 = vmatprep.subr.mxu0 0.0
        %2124 = vmatpush1.msra.mxu0 0.0
        %2125 = vmatprep.subr.mxu0 0.0
        %2126 = vmatpush1.msra.mxu0 0.0
        %2127 = vmatprep.subr.mxu0 0.0
        %2128 = vmatpush1.msra.mxu0 0.0
        %2129 = vmatprep.subr.mxu0 0.0
        %2130 = vmatpush1.msra.mxu0 0.0
        %2131 = vmatprep.subr.mxu0 0.0
        %2132 = vmatpush1.msra.mxu0 0.0
        %2133 = vmatprep.subr.mxu0 0.0
        %2134 = vmatpush1.msra.mxu0 0.0
        %2135 = vmatprep.subr.mxu0 0.0
        %2136 = vmatpush1.msra.mxu0 0.0
        %2137 = vmatprep.subr.mxu0 0.0
        %2138 = vmatpush1.msra.mxu0 0.0
        %2139 = vmatprep.subr.mxu0 0.0
        %2140 = vmatpush1.msra.mxu0 0.0
        %2141 = vmatprep.subr.mxu0 0.0
        %2142 = vmatpush1.msra.mxu0 0.0
        %2143 = vmatprep.subr.mxu0 0.0
        %2144 = vmatpush1.msra.mxu0 0.0
        %2145 = vmatprep.subr.mxu0 0.0
        %2146 = vmatpush1.msra.mxu0 0.0
        %2147 = vmatprep.subr.mxu0 0.0
        %2148 = vmatpush1.msra.mxu0 0.0
        %2149 = vmatprep.subr.mxu0 0.0
        %2150 = vmatpush1.msra.mxu0 0.0
        %2151 = vmatprep.subr.mxu0 0.0
        %2152 = vmatpush1.msra.mxu0 0.0
        %2153 = vmatprep.subr.mxu0 0.0
        %2154 = vmatpush1.msra.mxu0 0.0
        %2155 = vmatprep.subr.mxu0 0.0
        %2156 = vmatpush1.msra.mxu0 0.0
        %2157 = vmatprep.subr.mxu0 0.0
        %2158 = vmatpush1.msra.mxu0 0.0
        %2159 = vmatprep.subr.mxu0 0.0
        %2160 = vmatpush1.msra.mxu0 0.0
        %2161 = vmatprep.subr.mxu0 0.0
        %2162 = vmatpush1.msra.mxu0 0.0
        %2163 = vmatprep.subr.mxu0 0.0
        %2164 = vmatpush1.msra.mxu0 0.0
        %2165 = vmatprep.subr.mxu0 0.0
        %2166 = vmatpush1.msra.mxu0 0.0
        %2167 = vmatprep.subr.mxu0 0.0
        %2168 = vmatpush1.msra.mxu0 0.0
        %2169 = vmatprep.subr.mxu0 0.0
        %2170 = vmatpush1.msra.mxu0 0.0
        %2171 = vmatprep.subr.mxu0 0.0
        %2172 = vmatpush1.msra.mxu0 0.0
        %2173 = vmatprep.subr.mxu0 0.0
        %2174 = vmatpush1.msra.mxu0 0.0
        %2175 = vmatprep.subr.mxu0 0.0
        %2176 = vmatpush1.msra.mxu0 0.0
        %2177 = vmatprep.mubr.f32.mxu0 0.0
        %2178 = vmatmul.mubr.f32.gmra.mrb[0].mxu0 %v2111
        %v2179 = vpop.f32.mrb[0].mxu0
        %v2180 = vadd.f32 0.0, %v2179
        %v2181 = vpop.f32.mrb[0].mxu0
        %2182 = vdwg.mxu0
        %v2183 = vadd.f32 %v2101, %v2180
        %v2184 = vld [vmem:[#allocation4 + $0x3] sm:$0x1]
        %s2185 = scalar_lea.vmem %s8, 96
        %v2186 = vld [vmem:[%s2185] sm:$0xff]
        %v2187 = vld [vmem:[%s2185 + $0x8] sm:$0xff]
        %v2188 = vld [vmem:[%s2185 + $0x10] sm:$0xff]
        %v2189 = vld [vmem:[%s2185 + $0x18] sm:$0xff]
        %v2191 = vsel %vm1957, %v2184, 0
        %2193 = vmatprep.subr.mxu0 0.0
        %2194 = vmatpush1.msra.mxu0 %v2186
        %2195 = vmatprep.subr.mxu0 0.0
        %2196 = vmatpush1.msra.mxu0 %v2187
        %2197 = vmatprep.subr.mxu0 0.0
        %2198 = vmatpush1.msra.mxu0 %v2188
        %2199 = vmatprep.subr.mxu0 0.0
        %2200 = vmatpush1.msra.mxu0 %v2189
        %2201 = vmatprep.subr.mxu0 0.0
        %2202 = vmatpush1.msra.mxu0 0.0
        %2203 = vmatprep.subr.mxu0 0.0
        %2204 = vmatpush1.msra.mxu0 0.0
        %2205 = vmatprep.subr.mxu0 0.0
        %2206 = vmatpush1.msra.mxu0 0.0
        %2207 = vmatprep.subr.mxu0 0.0
        %2208 = vmatpush1.msra.mxu0 0.0
        %2209 = vmatprep.subr.mxu0 0.0
        %2210 = vmatpush1.msra.mxu0 0.0
        %2211 = vmatprep.subr.mxu0 0.0
        %2212 = vmatpush1.msra.mxu0 0.0
        %2213 = vmatprep.subr.mxu0 0.0
        %2214 = vmatpush1.msra.mxu0 0.0
        %2215 = vmatprep.subr.mxu0 0.0
        %2216 = vmatpush1.msra.mxu0 0.0
        %2217 = vmatprep.subr.mxu0 0.0
        %2218 = vmatpush1.msra.mxu0 0.0
        %2219 = vmatprep.subr.mxu0 0.0
        %2220 = vmatpush1.msra.mxu0 0.0
        %2221 = vmatprep.subr.mxu0 0.0
        %2222 = vmatpush1.msra.mxu0 0.0
        %2223 = vmatprep.subr.mxu0 0.0
        %2224 = vmatpush1.msra.mxu0 0.0
        %2225 = vmatprep.subr.mxu0 0.0
        %2226 = vmatpush1.msra.mxu0 0.0
        %2227 = vmatprep.subr.mxu0 0.0
        %2228 = vmatpush1.msra.mxu0 0.0
        %2229 = vmatprep.subr.mxu0 0.0
        %2230 = vmatpush1.msra.mxu0 0.0
        %2231 = vmatprep.subr.mxu0 0.0
        %2232 = vmatpush1.msra.mxu0 0.0
        %2233 = vmatprep.subr.mxu0 0.0
        %2234 = vmatpush1.msra.mxu0 0.0
        %2235 = vmatprep.subr.mxu0 0.0
        %2236 = vmatpush1.msra.mxu0 0.0
        %2237 = vmatprep.subr.mxu0 0.0
        %2238 = vmatpush1.msra.mxu0 0.0
        %2239 = vmatprep.subr.mxu0 0.0
        %2240 = vmatpush1.msra.mxu0 0.0
        %2241 = vmatprep.subr.mxu0 0.0
        %2242 = vmatpush1.msra.mxu0 0.0
        %2243 = vmatprep.subr.mxu0 0.0
        %2244 = vmatpush1.msra.mxu0 0.0
        %2245 = vmatprep.subr.mxu0 0.0
        %2246 = vmatpush1.msra.mxu0 0.0
        %2247 = vmatprep.subr.mxu0 0.0
        %2248 = vmatpush1.msra.mxu0 0.0
        %2249 = vmatprep.subr.mxu0 0.0
        %2250 = vmatpush1.msra.mxu0 0.0
        %2251 = vmatprep.subr.mxu0 0.0
        %2252 = vmatpush1.msra.mxu0 0.0
        %2253 = vmatprep.subr.mxu0 0.0
        %2254 = vmatpush1.msra.mxu0 0.0
        %2255 = vmatprep.subr.mxu0 0.0
        %2256 = vmatpush1.msra.mxu0 0.0
        %2257 = vmatprep.mubr.f32.mxu0 0.0
        %2258 = vmatmul.mubr.f32.gmra.mrb[0].mxu0 %v2191
        %v2259 = vpop.f32.mrb[0].mxu0
        %v2260 = vadd.f32 0.0, %v2259
        %v2261 = vpop.f32.mrb[0].mxu0
        %2262 = vdwg.mxu0
        %v2263 = vadd.f32 %v2183, %v2260
        %2264 = vst [vmem:[%s324] sm:$0x1] %v2263
        %s2265 = sand.u32 %s225, 1
        %s2266 = scalar_lea.sflag [#allocation6], %s2265
        %s2267 = sand.u32 %s225, 1
        %s2268 = scalar_lea.vmem [#allocation5], %s2267
        // Predicated region
        $region57: #{testfull_forward.1} parent=55 // pred_check
          %p2269 = pneg %p235
        $region58: #{testfull_forward.1} parent=55 // pred_check_branch
          %2271 = sbr.rel (%p2269) target = $region60
        $region59: #{testfull_forward.1} parent=55 // pred_region
          %s2273 = ssub.s32 16, 16
          %2274 = vsyncadd %s2266, %s2273
          %s2275 = smul.addr %s23, 16
          %s2276 = scalar_lea.hbm %s9, %s2275
          %s2278 = sshll.u32 %s2268, 4
          %s2279 = int_to_ptr.vmem [resolvable:$true] %s2278
          %2281 = dma.vmem_to_hbm [thread:$0]  %s2279, 16, %s2276, %s2266
        $region60: #{testfull_forward.1} parent=55 // pred_fallthru
          _
      $region56: #{testfull_forward.1} parent=5 // pred_fallthru
        _
      %p2282 = scmp.le.s32.totalorder 2, %s18
      // Predicated region
      $region61: #{testfull_forward.1} parent=5 // pred_check
        %p2283 = pneg %p2282
      $region62: #{testfull_forward.1} parent=5 // pred_check_branch
        %2285 = sbr.rel (%p2283) target = $region64
      $region63: #{testfull_forward.1} parent=5 // pred_region
        %s2286 = ssub.s32 %s18, 2
        // Predicated region
        $region65: #{testfull_forward.1} parent=63 // pred_check
          %p2287 = pneg %p241
        $region66: #{testfull_forward.1} parent=63 // pred_check_branch
          %2289 = sbr.rel (%p2287) target = $region68
        $region67: #{testfull_forward.1} parent=63 // pred_region
          %s2290 = sand.u32 %s226, 1
          %s2291 = scalar_lea.sflag [#allocation6], %s2290
          %s2292 = sand.u32 %s226, 1
          %s2293 = scalar_lea.vmem [#allocation5], %s2292
          %2294 = dma.done %s2291, 16
        $region68: #{testfull_forward.1} parent=63 // pred_fallthru
          _
      $region64: #{testfull_forward.1} parent=5 // pred_fallthru
        _
    $region6: #{testfull_forward.1} parent=1 // loop_footer
      %s22 = sadd.s32 1, %s18
    $region7: #{testfull_forward.1} parent=1 // loop_footer_branch
      %17 = sbr.rel target = $region3
    $region8: #{testfull_forward.1} parent=1 // loop_exit
      _
    %2295 = vsyncpa [#allocation6], 1
    %s2296 = scalar_lea.sflag [#allocation6], 1
    %2297 = vsyncpa %s2296, 1

</llo_original>
